<compile_context>
chip_gen: v7x
topology: tpu7x:2x2x1
jax: 0.10.0
libtpu: 0.0.40
codegen_flags: <defaults>
</compile_context>

<pallas_src>
import jax
import jax.numpy as jnp
from jax.experimental import pallas as pl
from jax.experimental.pallas import tpu as pltpu

# ------------------------- model configuration (synthetic "opt") -------------------------
B = 2              # batch
N_REGIONS = 16     # visual regions
T = 8              # question length
DIM_V = 32         # dim_v
DIM_Q = 32         # dim_q
DIM_ATT = 32       # attention dim_q
NB_GLIMPSES = 2    # attention nb_glimpses
DIM_H = 32         # dim_hv / nb_glimpses
DIM_HV = NB_GLIMPSES * DIM_H   # 64
DIM_HQ = 32        # fusion dim_hq
DIM_MM = 32        # fusion dim_mm  (== DIM_HQ so the dual smooth-L1 losses are shape-valid)
R_MUTAN = 3        # Mutan rank
DIM_EMB = 32       # vqg vec2seq dim_embedding
VOCAB_WORDS = 50
VOCAB_ANSWERS = 20

VMEM_SPEC = pl.BlockSpec(memory_space=pltpu.MemorySpace.VMEM)


# --------------------------------- fused forward kernel ----------------------------------
def _dual_forward_kernel(
    # inputs
    v_ref,        # (2B, N, DIM_V)      visual features, duplicated for the two branches
    xblk_ref,     # (2B, DIM_Q+DIM_MM)  block-diag [x_q_vec | 0 ; 0 | x_a_embedding]
    wctx_ref,     # (DIM_Q+DIM_MM, DIM_ATT+DIM_HQ) packed [q_att|q_fus ; a_att|a_fus] weights
    bctx_ref,     # (2B, DIM_ATT+DIM_HQ) per-row packed biases
    wvatt_ref,    # (DIM_V, DIM_ATT)    shared attention visual projection
    wscore_ref,   # (G, DIM_ATT)        shared attention score weights
    bscore_ref,   # (G, 1)
    wgl_ref,      # (G, DIM_V, DIM_H)   shared glimpse-fusion weights (pre-transposed)
    bgl_ref,      # (G, DIM_H)
    wmv_ref,      # (DIM_HV, R*DIM_MM)  Mutan visual weights, rank-concatenated
    bmv_ref,      # (1, R*DIM_MM)
    wmq_ref,      # (DIM_HQ, R*DIM_MM)  Mutan question weights, rank-concatenated
    bmq_ref,      # (1, R*DIM_MM)
    wcls_ref,     # (DIM_MM, VOCAB_ANSWERS)
    bcls_ref,     # (1, VOCAB_ANSWERS)
    wva_ref,      # (DIM_MM, DIM_EMB)
    bva_ref,      # (1, DIM_EMB)
    qemb_ref,     # (B, T, DIM_EMB)     question token embeddings (vec2seq side)
    wout_ref,     # (DIM_EMB, VOCAB_WORDS)
    bout_ref,     # (1, VOCAB_WORDS)
    # outputs
    ans_ref,      # (B, VOCAB_ANSWERS)
    qst_ref,      # (B, T, VOCAB_WORDS)
    loss_ref,     # (1, 1)
    # scratch
    vatt_scr,     # (2B, G, DIM_V)
):
    f32 = jnp.float32

    # ---- per-branch context projections: attention query + fusion pre-activation ----
    # rows 0:B  = VQA branch (question vector), rows B:2B = VQG branch (answer embedding)
    pre = jnp.dot(xblk_ref[...], wctx_ref[...], preferred_element_type=f32) + bctx_ref[...]
    att_both = jnp.tanh(pre[:, :DIM_ATT])            # (2B, DIM_ATT) attention queries
    fus_pre = pre[:, DIM_ATT:]                       # (2B, DIM_HQ)  pre-activation (for losses)

    # ---- shared attention over regions (both branches batched) ----
    v = v_ref[...]                                                    # (2B, N, DIM_V)
    hv = jnp.tanh(jnp.einsum("bnd,da->bna", v, wvatt_ref[...],
                             preferred_element_type=f32))             # (2B, N, DIM_ATT)
    joint = hv * att_both[:, None, :]
    scores = jnp.einsum("bna,ga->bgn", joint, wscore_ref[...],
                        preferred_element_type=f32)                   # (2B, G, N)
    scores = scores + bscore_ref[...][None]
    scores = scores - jnp.max(scores, axis=-1, keepdims=True)
    e = jnp.exp(scores)
    alpha = e * pl.reciprocal(jnp.sum(e, axis=-1, keepdims=True), approx=True)
    vatt_scr[...] = jnp.einsum("bgn,bnd->bgd", alpha, v,
                               preferred_element_type=f32)            # (2B, G, DIM_V)

    # ---- glimpse fusion folded into the Mutan visual projection ----
    # x_v = [tanh(v_att_0 @ Wg0 + b0) | tanh(v_att_1 @ Wg1 + b1)]  (never materialized);
    # x_v @ W_mv == sum_g x_g @ W_mv[g*DIM_H:(g+1)*DIM_H]
    mv_pre = bmv_ref[...]
    for g in range(NB_GLIMPSES):
        xg = jnp.tanh(jnp.dot(vatt_scr[:, g, :], wgl_ref[g],
                              preferred_element_type=f32) + bgl_ref[g:g + 1, :])
        mv_pre = mv_pre + jnp.dot(xg, wmv_ref[g * DIM_H:(g + 1) * DIM_H, :],
                                  preferred_element_type=f32)

    # ---- Mutan fusion: all ranks in one matmul pair, lane-slice rank-sum ----
    hv_all = jnp.tanh(mv_pre)                                         # (2B, R*DIM_MM)
    hq_all = jnp.tanh(jnp.dot(jnp.tanh(fus_pre), wmq_ref[...],
                              preferred_element_type=f32) + bmq_ref[...])
    prod = hv_all * hq_all                                            # (2B, R*DIM_MM)
    acc = prod[:, 0:DIM_MM]
    for r in range(1, R_MUTAN):
        acc = acc + prod[:, r * DIM_MM:(r + 1) * DIM_MM]
    mm = jnp.tanh(acc)                                                # (2B, DIM_MM)

    x_a_pred = mm[0:B]            # VQA Mutan output
    x_q_pred = mm[B:2 * B]        # VQG Mutan output

    # ---- VQA classifier ----
    ans_ref[...] = (jnp.dot(jnp.tanh(x_a_pred), wcls_ref[...],
                            preferred_element_type=f32) + bcls_ref[...])

    # ---- VQG question generation ----
    # TODO(synk): real question_generation is an LSTM decoder (teacher forcing / beam
    # search); approximated as token embedding + context add + vocab projection.
    x_va = jnp.tanh(jnp.dot(jnp.tanh(x_q_pred), wva_ref[...],
                            preferred_element_type=f32) + bva_ref[...])   # (B, DIM_EMB)
    h = jnp.tanh(qemb_ref[...] + x_va[:, None, :])                        # (B, T, DIM_EMB)
    qst_ref[...] = (jnp.einsum("btd,dv->btv", h, wout_ref[...],
                               preferred_element_type=f32) + bout_ref[...][None])

    # ---- dual consistency loss: smooth_l1(x_a_pred, x_a_fus) + smooth_l1(x_q_pred, x_q) ----
    x_q_fus_pre = fus_pre[0:B]        # pre-activation linear_q_fusion (VQA branch)
    x_a_fus_pre = fus_pre[B:2 * B]    # pre-activation linear_a_fusion (VQG branch)

    def _sl1_mean(d):
        ad = jnp.abs(d)
        return jnp.mean(jnp.where(ad < 1.0, 0.5 * d * d, ad - 0.5))

    loss = _sl1_mean(x_a_pred - x_a_fus_pre) + _sl1_mean(x_q_pred - x_q_fus_pre)
    loss_ref[...] = jnp.broadcast_to(loss, (1, 1))


# ------------------------------------- parameters ---------------------------------------
def init_params(key):
    ks = jax.random.split(key, 26)

    def w(k, shape, scale=0.1):
        return scale * jax.random.normal(k, shape, dtype=jnp.float32)

    return {
        # seq2vec (embedding; RNN approximated by mean-pooling)
        "seq2vec_emb": w(ks[0], (VOCAB_WORDS, DIM_Q)),
        # linear_q_att / linear_a_att     (PyTorch (Dout, Din) convention)
        "w_q_att": w(ks[1], (DIM_ATT, DIM_Q)), "b_q_att": w(ks[2], (DIM_ATT,)),
        "w_a_att": w(ks[3], (DIM_ATT, DIM_MM)), "b_a_att": w(ks[4], (DIM_ATT,)),
        # shared attention module (use_linear=False)
        "w_v_att": w(ks[5], (DIM_ATT, DIM_V)),
        "w_score": w(ks[6], (NB_GLIMPSES, DIM_ATT)),
        "b_score": w(ks[7], (NB_GLIMPSES, 1)),
        # shared list_linear_v_fusion
        "w_glimpse": w(ks[8], (NB_GLIMPSES, DIM_H, DIM_V)),
        "b_glimpse": w(ks[9], (NB_GLIMPSES, DIM_H)),
        # linear_q_fusion / linear_a_fusion
        "w_q_fusion": w(ks[10], (DIM_HQ, DIM_Q)), "b_q_fusion": w(ks[11], (DIM_HQ,)),
        "w_a_fusion": w(ks[12], (DIM_HQ, DIM_MM)), "b_a_fusion": w(ks[13], (DIM_HQ,)),
        # shared MutanFusion (rank R)
        "w_mutan_hv": w(ks[14], (R_MUTAN, DIM_MM, DIM_HV)),
        "b_mutan_hv": w(ks[15], (R_MUTAN, DIM_MM)),
        "w_mutan_hq": w(ks[16], (R_MUTAN, DIM_MM, DIM_HQ)),
        "b_mutan_hq": w(ks[17], (R_MUTAN, DIM_MM)),
        # classifier + answer embeddings
        "w_classif": w(ks[18], (VOCAB_ANSWERS, DIM_MM)), "b_classif": w(ks[19], (VOCAB_ANSWERS,)),
        "answer_emb": w(ks[20], (VOCAB_ANSWERS, DIM_MM)),
        # linear_va_transform + question_generation (vec2seq)
        "w_va_transform": w(ks[21], (DIM_EMB, DIM_MM)), "b_va_transform": w(ks[22], (DIM_EMB,)),
        "vec2seq_emb": w(ks[23], (VOCAB_WORDS, DIM_EMB)),
        "w_out": w(ks[24], (VOCAB_WORDS, DIM_EMB)), "b_out": w(ks[25], (VOCAB_WORDS,)),
    }


# ------------------------------------ forward (train) -----------------------------------
def dual_model_forward(params, input_v, input_q, target_a):
    p = params
    f32 = jnp.float32

    # ---- plain-JAX glue: embedding gathers + seq2vec approximation ----
    # TODO(synk): real seq2vec is an LSTM/GRU; approximated by mean-pooled token embeddings.
    q_tok_emb = jnp.take(p["seq2vec_emb"], input_q, axis=0)          # (B, T, DIM_Q)
    x_q_vec = jnp.mean(q_tok_emb, axis=1)                            # (B, DIM_Q)
    x_a_emb = jnp.take(p["answer_emb"], target_a, axis=0)            # (B, DIM_MM)
    q_word_emb = jnp.take(p["vec2seq_emb"], input_q, axis=0)         # (B, T, DIM_EMB)

    # ---- pack / pre-transpose weights (free XLA-side plumbing) ----
    # Block-diagonal context input + packed weights: one matmul covers the four
    # per-branch linears (q_att, q_fusion, a_att, a_fusion).
    x_blk = jnp.concatenate([
        jnp.concatenate([x_q_vec, jnp.zeros((B, DIM_MM), f32)], axis=1),
        jnp.concatenate([jnp.zeros((B, DIM_Q), f32), x_a_emb], axis=1)], axis=0)
    w_ctx = jnp.concatenate([
        jnp.concatenate([p["w_q_att"].T, p["w_q_fusion"].T], axis=1),
        jnp.concatenate([p["w_a_att"].T, p["w_a_fusion"].T], axis=1)], axis=0)
    b_ctx = jnp.concatenate([
        jnp.tile(jnp.concatenate([p["b_q_att"], p["b_q_fusion"]])[None, :], (B, 1)),
        jnp.tile(jnp.concatenate([p["b_a_att"], p["b_a_fusion"]])[None, :], (B, 1))], axis=0)

    # Visual features duplicated so both branches share the same batched attention.
    v_both = jnp.concatenate([input_v, input_v], axis=0)             # (2B, N, DIM_V)

    w_v_att_t = p["w_v_att"].T                                       # (DIM_V, DIM_ATT)
    w_gl_t = jnp.transpose(p["w_glimpse"], (0, 2, 1))                # (G, DIM_V, DIM_H)

    # Mutan rank weights concatenated along the output dim -> one matmul per side.
    w_mv = jnp.transpose(p["w_mutan_hv"], (2, 0, 1)).reshape(DIM_HV, R_MUTAN * DIM_MM)
    b_mv = p["b_mutan_hv"].reshape(1, R_MUTAN * DIM_MM)
    w_mq = jnp.transpose(p["w_mutan_hq"], (2, 0, 1)).reshape(DIM_HQ, R_MUTAN * DIM_MM)
    b_mq = p["b_mutan_hq"].reshape(1, R_MUTAN * DIM_MM)

    w_cls_t = p["w_classif"].T
    b_cls = p["b_classif"].reshape(1, VOCAB_ANSWERS)
    w_va_t = p["w_va_transform"].T
    b_va = p["b_va_transform"].reshape(1, DIM_EMB)
    w_out_t = p["w_out"].T
    b_out = p["b_out"].reshape(1, VOCAB_WORDS)

    answers, questions, loss = pl.pallas_call(
        _dual_forward_kernel,
        out_shape=(
            jax.ShapeDtypeStruct((B, VOCAB_ANSWERS), f32),
            jax.ShapeDtypeStruct((B, T, VOCAB_WORDS), f32),
            jax.ShapeDtypeStruct((1, 1), f32),
        ),
        in_specs=[VMEM_SPEC] * 20,
        out_specs=(VMEM_SPEC, VMEM_SPEC, VMEM_SPEC),
        scratch_shapes=[pltpu.VMEM((2 * B, NB_GLIMPSES, DIM_V), f32)],
    )(
        v_both, x_blk, w_ctx, b_ctx,
        w_v_att_t, p["w_score"], p["b_score"],
        w_gl_t, p["b_glimpse"],
        w_mv, b_mv, w_mq, b_mq,
        w_cls_t, b_cls, w_va_t, b_va,
        q_word_emb, w_out_t, b_out,
    )
    return answers, questions, loss[0, 0]


# ------------------------------------------ main -----------------------------------------
if __name__ == "__main__":
    key = jax.random.PRNGKey(0)
    pkey, vkey, qkey, akey = jax.random.split(key, 4)
    params = init_params(pkey)

    input_v = jax.random.normal(vkey, (B, N_REGIONS, DIM_V), dtype=jnp.float32)
    input_q = jax.random.randint(qkey, (B, T), 0, VOCAB_WORDS, dtype=jnp.int32)
    target_a = jax.random.randint(akey, (B,), 0, VOCAB_ANSWERS, dtype=jnp.int32)

    answers, questions, loss = jax.jit(dual_model_forward)(params, input_v, input_q, target_a)
    jax.block_until_ready((answers, questions, loss))

    assert answers.shape == (B, VOCAB_ANSWERS)
    assert questions.shape == (B, T, VOCAB_WORDS)
    assert loss.shape == ()
    print("KERNEL_OK")
</pallas_src>

<mosaic_0001>
module attributes {stable_mosaic.version = 11 : i64} {
  func.func @_dual_forward_kernel(%arg0: memref<4x16x32xf32, #tpu.memory_space<vmem>>, %arg1: memref<4x64xf32, #tpu.memory_space<vmem>>, %arg2: memref<64x64xf32, #tpu.memory_space<vmem>>, %arg3: memref<4x64xf32, #tpu.memory_space<vmem>>, %arg4: memref<32x32xf32, #tpu.memory_space<vmem>>, %arg5: memref<2x32xf32, #tpu.memory_space<vmem>>, %arg6: memref<2x1xf32, #tpu.memory_space<vmem>>, %arg7: memref<2x32x32xf32, #tpu.memory_space<vmem>>, %arg8: memref<2x32xf32, #tpu.memory_space<vmem>>, %arg9: memref<64x96xf32, #tpu.memory_space<vmem>>, %arg10: memref<1x96xf32, #tpu.memory_space<vmem>>, %arg11: memref<32x96xf32, #tpu.memory_space<vmem>>, %arg12: memref<1x96xf32, #tpu.memory_space<vmem>>, %arg13: memref<32x20xf32, #tpu.memory_space<vmem>>, %arg14: memref<1x20xf32, #tpu.memory_space<vmem>>, %arg15: memref<32x32xf32, #tpu.memory_space<vmem>>, %arg16: memref<1x32xf32, #tpu.memory_space<vmem>>, %arg17: memref<2x8x32xf32, #tpu.memory_space<vmem>>, %arg18: memref<32x50xf32, #tpu.memory_space<vmem>>, %arg19: memref<1x50xf32, #tpu.memory_space<vmem>>, %arg20: memref<2x20xf32, #tpu.memory_space<vmem>>, %arg21: memref<2x8x50xf32, #tpu.memory_space<vmem>>, %arg22: memref<1x1xf32, #tpu.memory_space<vmem>>, %arg23: memref<4x2x32xf32, #tpu.memory_space<vmem>>) attributes {dimension_semantics = [], scalar_prefetch = 0 : i64, scratch_operands = 1 : i64, tpu.core_type = #tpu.core_type<tc>} {
    %c0 = arith.constant 0 : index
    %c0_0 = arith.constant 0 : index
    %0 = vector.load %arg1[%c0, %c0_0] : memref<4x64xf32, #tpu.memory_space<vmem>>, vector<4x64xf32>
    %c0_1 = arith.constant 0 : index
    %c0_2 = arith.constant 0 : index
    %1 = vector.load %arg2[%c0_1, %c0_2] : memref<64x64xf32, #tpu.memory_space<vmem>>, vector<64x64xf32>
    %cst = arith.constant dense<0.000000e+00> : vector<4x64xf32>
    %2 = tpu.matmul %0, %1, %cst {dimension_numbers = #tpu.dot_dimension_numbers<[1], [0], [0], [1], [0, 0, 1, 1], [], []>} : vector<4x64xf32>, vector<64x64xf32>, vector<4x64xf32> -> vector<4x64xf32>
    %c0_3 = arith.constant 0 : index
    %c0_4 = arith.constant 0 : index
    %3 = vector.load %arg3[%c0_3, %c0_4] : memref<4x64xf32, #tpu.memory_space<vmem>>, vector<4x64xf32>
    %4 = arith.addf %2, %3 : vector<4x64xf32>
    %5 = vector.extract_strided_slice %4 {offsets = [0, 0], sizes = [4, 32], strides = [1, 1]} : vector<4x64xf32> to vector<4x32xf32>
    %6 = math.tanh %5 : vector<4x32xf32>
    %7 = vector.extract_strided_slice %4 {offsets = [0, 32], sizes = [4, 32], strides = [1, 1]} : vector<4x64xf32> to vector<4x32xf32>
    %c0_5 = arith.constant 0 : index
    %c0_6 = arith.constant 0 : index
    %c0_7 = arith.constant 0 : index
    %8 = vector.load %arg0[%c0_5, %c0_6, %c0_7] : memref<4x16x32xf32, #tpu.memory_space<vmem>>, vector<4x16x32xf32>
    %c0_8 = arith.constant 0 : index
    %c0_9 = arith.constant 0 : index
    %9 = vector.load %arg4[%c0_8, %c0_9] : memref<32x32xf32, #tpu.memory_space<vmem>>, vector<32x32xf32>
    "tpu.trace_start"() <{level = 10 : i32, message = "bnd,da->bna"}> : () -> ()
    %cst_10 = arith.constant dense<0.000000e+00> : vector<4x16x32xf32>
    %10 = tpu.matmul %8, %9, %cst_10 {dimension_numbers = #tpu.dot_dimension_numbers<[2], [0], [0, 1], [1], [0, 0, 0, 1, 1, 1], [], []>} : vector<4x16x32xf32>, vector<32x32xf32>, vector<4x16x32xf32> -> vector<4x16x32xf32>
    "tpu.trace_stop"() : () -> ()
    %11 = math.tanh %10 : vector<4x16x32xf32>
    %12 = vector.shape_cast %6 : vector<4x32xf32> to vector<4x1x32xf32>
    %13 = vector.broadcast %12 : vector<4x1x32xf32> to vector<4x16x32xf32>
    %14 = arith.mulf %11, %13 : vector<4x16x32xf32>
    %c0_11 = arith.constant 0 : index
    %c0_12 = arith.constant 0 : index
    %15 = vector.load %arg5[%c0_11, %c0_12] : memref<2x32xf32, #tpu.memory_space<vmem>>, vector<2x32xf32>
    "tpu.trace_start"() <{level = 10 : i32, message = "bna,ga->bgn"}> : () -> ()
    %cst_13 = arith.constant dense<0.000000e+00> : vector<2x4x16xf32>
    %16 = tpu.matmul %15, %14, %cst_13 {dimension_numbers = #tpu.dot_dimension_numbers<[1], [2], [0], [0, 1], [0, 0, 1, 0, 1, 1], [], []>} : vector<2x32xf32>, vector<4x16x32xf32>, vector<2x4x16xf32> -> vector<2x4x16xf32>
    %17 = tpu.transpose %16, [1, 0, 2] : vector<2x4x16xf32> -> vector<4x2x16xf32>
    "tpu.trace_stop"() : () -> ()
    %c0_14 = arith.constant 0 : index
    %c0_15 = arith.constant 0 : index
    %18 = vector.load %arg6[%c0_14, %c0_15] : memref<2x1xf32, #tpu.memory_space<vmem>>, vector<2x1xf32>
    %19 = vector.shape_cast %18 : vector<2x1xf32> to vector<1x2x1xf32>
    %20 = vector.broadcast %19 : vector<1x2x1xf32> to vector<4x2x16xf32>
    %21 = arith.addf %17, %20 : vector<4x2x16xf32>
    %cst_16 = arith.constant dense<0xFF800000> : vector<4x2xf32>
    %22 = vector.multi_reduction <maximumf>, %21, %cst_16 [2] : vector<4x2x16xf32> to vector<4x2xf32>
    %23 = vector.shape_cast %22 : vector<4x2xf32> to vector<4x2x1xf32>
    %24 = vector.broadcast %23 : vector<4x2x1xf32> to vector<4x2x16xf32>
    %25 = arith.subf %21, %24 : vector<4x2x16xf32>
    %26 = math.exp %25 : vector<4x2x16xf32>
    %cst_17 = arith.constant dense<0.000000e+00> : vector<4x2xf32>
    %27 = vector.multi_reduction <add>, %26, %cst_17 [2] : vector<4x2x16xf32> to vector<4x2xf32>
    %28 = vector.shape_cast %27 : vector<4x2xf32> to vector<4x2x1xf32>
    %29 = tpu.reciprocal %28 {approx = true} : vector<4x2x1xf32> -> vector<4x2x1xf32>
    %30 = vector.broadcast %29 : vector<4x2x1xf32> to vector<4x2x16xf32>
    %31 = arith.mulf %26, %30 : vector<4x2x16xf32>
    "tpu.trace_start"() <{level = 10 : i32, message = "bgn,bnd->bgd"}> : () -> ()
    %cst_18 = arith.constant dense<0.000000e+00> : vector<4x2x32xf32>
    %32 = tpu.matmul %31, %8, %cst_18 {dimension_numbers = #tpu.dot_dimension_numbers<[2], [1], [1], [2], [0, 0, 0, 1, 1, 2], [0], [0]>} : vector<4x2x16xf32>, vector<4x16x32xf32>, vector<4x2x32xf32> -> vector<4x2x32xf32>
    "tpu.trace_stop"() : () -> ()
    %c0_19 = arith.constant 0 : index
    %c0_20 = arith.constant 0 : index
    %c0_21 = arith.constant 0 : index
    %33 = vector.load %arg23[%c0_19, %c0_20, %c0_21] : memref<4x2x32xf32, #tpu.memory_space<vmem>>, vector<4x2x32xf32>
    tpu.vector_store %arg23[%c0_19, %c0_20, %c0_21], %32 {strides = array<i32>} : memref<4x2x32xf32, #tpu.memory_space<vmem>>, vector<4x2x32xf32>,
    %c0_22 = arith.constant 0 : index
    %c0_23 = arith.constant 0 : index
    %34 = vector.load %arg10[%c0_22, %c0_23] : memref<1x96xf32, #tpu.memory_space<vmem>>, vector<1x96xf32>
    %c0_24 = arith.constant 0 : index
    %c0_25 = arith.constant 0 : index
    %c0_26 = arith.constant 0 : index
    %35 = vector.load %arg23[%c0_24, %c0_25, %c0_26] : memref<4x2x32xf32, #tpu.memory_space<vmem>>, vector<4x1x32xf32>
    %36 = vector.shape_cast %35 : vector<4x1x32xf32> to vector<4x32xf32>
    %c0_27 = arith.constant 0 : index
    %c0_28 = arith.constant 0 : index
    %c0_29 = arith.constant 0 : index
    %37 = vector.load %arg7[%c0_27, %c0_28, %c0_29] : memref<2x32x32xf32, #tpu.memory_space<vmem>>, vector<1x32x32xf32>
    %38 = vector.shape_cast %37 : vector<1x32x32xf32> to vector<32x32xf32>
    %cst_30 = arith.constant dense<0.000000e+00> : vector<4x32xf32>
    %39 = tpu.matmul %36, %38, %cst_30 {dimension_numbers = #tpu.dot_dimension_numbers<[1], [0], [0], [1], [0, 0, 1, 1], [], []>} : vector<4x32xf32>, vector<32x32xf32>, vector<4x32xf32> -> vector<4x32xf32>
    %c0_31 = arith.constant 0 : index
    %c0_32 = arith.constant 0 : index
    %40 = vector.load %arg8[%c0_31, %c0_32] : memref<2x32xf32, #tpu.memory_space<vmem>>, vector<1x32xf32>
    %41 = vector.broadcast %40 : vector<1x32xf32> to vector<4x32xf32>
    %42 = arith.addf %39, %41 : vector<4x32xf32>
    %43 = math.tanh %42 : vector<4x32xf32>
    %c0_33 = arith.constant 0 : index
    %c0_34 = arith.constant 0 : index
    %44 = vector.load %arg9[%c0_33, %c0_34] : memref<64x96xf32, #tpu.memory_space<vmem>>, vector<32x96xf32>
    %cst_35 = arith.constant dense<0.000000e+00> : vector<4x96xf32>
    %45 = tpu.matmul %43, %44, %cst_35 {dimension_numbers = #tpu.dot_dimension_numbers<[1], [0], [0], [1], [0, 0, 1, 1], [], []>} : vector<4x32xf32>, vector<32x96xf32>, vector<4x96xf32> -> vector<4x96xf32>
    %46 = vector.broadcast %34 : vector<1x96xf32> to vector<4x96xf32>
    %47 = arith.addf %46, %45 : vector<4x96xf32>
    %c0_36 = arith.constant 0 : index
    %c1 = arith.constant 1 : index
    %c0_37 = arith.constant 0 : index
    %48 = vector.load %arg23[%c0_36, %c1, %c0_37] : memref<4x2x32xf32, #tpu.memory_space<vmem>>, vector<4x1x32xf32>
    %49 = vector.shape_cast %48 : vector<4x1x32xf32> to vector<4x32xf32>
    %c1_38 = arith.constant 1 : index
    %c0_39 = arith.constant 0 : index
    %c0_40 = arith.constant 0 : index
    %50 = vector.load %arg7[%c1_38, %c0_39, %c0_40] : memref<2x32x32xf32, #tpu.memory_space<vmem>>, vector<1x32x32xf32>
    %51 = vector.shape_cast %50 : vector<1x32x32xf32> to vector<32x32xf32>
    %cst_41 = arith.constant dense<0.000000e+00> : vector<4x32xf32>
    %52 = tpu.matmul %49, %51, %cst_41 {dimension_numbers = #tpu.dot_dimension_numbers<[1], [0], [0], [1], [0, 0, 1, 1], [], []>} : vector<4x32xf32>, vector<32x32xf32>, vector<4x32xf32> -> vector<4x32xf32>
    %c1_42 = arith.constant 1 : index
    %c0_43 = arith.constant 0 : index
    %53 = vector.load %arg8[%c1_42, %c0_43] : memref<2x32xf32, #tpu.memory_space<vmem>>, vector<1x32xf32>
    %54 = vector.broadcast %53 : vector<1x32xf32> to vector<4x32xf32>
    %55 = arith.addf %52, %54 : vector<4x32xf32>
    %56 = math.tanh %55 : vector<4x32xf32>
    %c32 = arith.constant 32 : index
    %c0_44 = arith.constant 0 : index
    %57 = vector.load %arg9[%c32, %c0_44] : memref<64x96xf32, #tpu.memory_space<vmem>>, vector<32x96xf32>
    %cst_45 = arith.constant dense<0.000000e+00> : vector<4x96xf32>
    %58 = tpu.matmul %56, %57, %cst_45 {dimension_numbers = #tpu.dot_dimension_numbers<[1], [0], [0], [1], [0, 0, 1, 1], [], []>} : vector<4x32xf32>, vector<32x96xf32>, vector<4x96xf32> -> vector<4x96xf32>
    %59 = arith.addf %47, %58 : vector<4x96xf32>
    %60 = math.tanh %59 : vector<4x96xf32>
    %61 = math.tanh %7 : vector<4x32xf32>
    %c0_46 = arith.constant 0 : index
    %c0_47 = arith.constant 0 : index
    %62 = vector.load %arg11[%c0_46, %c0_47] : memref<32x96xf32, #tpu.memory_space<vmem>>, vector<32x96xf32>
    %cst_48 = arith.constant dense<0.000000e+00> : vector<4x96xf32>
    %63 = tpu.matmul %61, %62, %cst_48 {dimension_numbers = #tpu.dot_dimension_numbers<[1], [0], [0], [1], [0, 0, 1, 1], [], []>} : vector<4x32xf32>, vector<32x96xf32>, vector<4x96xf32> -> vector<4x96xf32>
    %c0_49 = arith.constant 0 : index
    %c0_50 = arith.constant 0 : index
    %64 = vector.load %arg12[%c0_49, %c0_50] : memref<1x96xf32, #tpu.memory_space<vmem>>, vector<1x96xf32>
    %65 = vector.broadcast %64 : vector<1x96xf32> to vector<4x96xf32>
    %66 = arith.addf %63, %65 : vector<4x96xf32>
    %67 = math.tanh %66 : vector<4x96xf32>
    %68 = arith.mulf %60, %67 : vector<4x96xf32>
    %69 = vector.extract_strided_slice %68 {offsets = [0, 0], sizes = [4, 32], strides = [1, 1]} : vector<4x96xf32> to vector<4x32xf32>
    %70 = vector.extract_strided_slice %68 {offsets = [0, 32], sizes = [4, 32], strides = [1, 1]} : vector<4x96xf32> to vector<4x32xf32>
    %71 = arith.addf %69, %70 : vector<4x32xf32>
    %72 = vector.extract_strided_slice %68 {offsets = [0, 64], sizes = [4, 32], strides = [1, 1]} : vector<4x96xf32> to vector<4x32xf32>
    %73 = arith.addf %71, %72 : vector<4x32xf32>
    %74 = math.tanh %73 : vector<4x32xf32>
    %75 = vector.extract_strided_slice %74 {offsets = [0, 0], sizes = [2, 32], strides = [1, 1]} : vector<4x32xf32> to vector<2x32xf32>
    %76 = vector.extract_strided_slice %74 {offsets = [2, 0], sizes = [2, 32], strides = [1, 1]} : vector<4x32xf32> to vector<2x32xf32>
    %77 = math.tanh %75 : vector<2x32xf32>
    %c0_51 = arith.constant 0 : index
    %c0_52 = arith.constant 0 : index
    %78 = vector.load %arg13[%c0_51, %c0_52] : memref<32x20xf32, #tpu.memory_space<vmem>>, vector<32x20xf32>
    %cst_53 = arith.constant dense<0.000000e+00> : vector<2x20xf32>
    %79 = tpu.matmul %77, %78, %cst_53 {dimension_numbers = #tpu.dot_dimension_numbers<[1], [0], [0], [1], [0, 0, 1, 1], [], []>} : vector<2x32xf32>, vector<32x20xf32>, vector<2x20xf32> -> vector<2x20xf32>
    %c0_54 = arith.constant 0 : index
    %c0_55 = arith.constant 0 : index
    %80 = vector.load %arg14[%c0_54, %c0_55] : memref<1x20xf32, #tpu.memory_space<vmem>>, vector<1x20xf32>
    %81 = vector.broadcast %80 : vector<1x20xf32> to vector<2x20xf32>
    %82 = arith.addf %79, %81 : vector<2x20xf32>
    %c0_56 = arith.constant 0 : index
    %c0_57 = arith.constant 0 : index
    %83 = vector.load %arg20[%c0_56, %c0_57] : memref<2x20xf32, #tpu.memory_space<vmem>>, vector<2x20xf32>
    tpu.vector_store %arg20[%c0_56, %c0_57], %82 {strides = array<i32>} : memref<2x20xf32, #tpu.memory_space<vmem>>, vector<2x20xf32>,
    %84 = math.tanh %76 : vector<2x32xf32>
    %c0_58 = arith.constant 0 : index
    %c0_59 = arith.constant 0 : index
    %85 = vector.load %arg15[%c0_58, %c0_59] : memref<32x32xf32, #tpu.memory_space<vmem>>, vector<32x32xf32>
    %cst_60 = arith.constant dense<0.000000e+00> : vector<2x32xf32>
    %86 = tpu.matmul %84, %85, %cst_60 {dimension_numbers = #tpu.dot_dimension_numbers<[1], [0], [0], [1], [0, 0, 1, 1], [], []>} : vector<2x32xf32>, vector<32x32xf32>, vector<2x32xf32> -> vector<2x32xf32>
    %c0_61 = arith.constant 0 : index
    %c0_62 = arith.constant 0 : index
    %87 = vector.load %arg16[%c0_61, %c0_62] : memref<1x32xf32, #tpu.memory_space<vmem>>, vector<1x32xf32>
    %88 = vector.broadcast %87 : vector<1x32xf32> to vector<2x32xf32>
    %89 = arith.addf %86, %88 : vector<2x32xf32>
    %90 = math.tanh %89 : vector<2x32xf32>
    %c0_63 = arith.constant 0 : index
    %c0_64 = arith.constant 0 : index
    %c0_65 = arith.constant 0 : index
    %91 = vector.load %arg17[%c0_63, %c0_64, %c0_65] : memref<2x8x32xf32, #tpu.memory_space<vmem>>, vector<2x8x32xf32>
    %92 = vector.shape_cast %90 : vector<2x32xf32> to vector<2x1x32xf32>
    %93 = vector.broadcast %92 : vector<2x1x32xf32> to vector<2x8x32xf32>
    %94 = arith.addf %91, %93 : vector<2x8x32xf32>
    %95 = math.tanh %94 : vector<2x8x32xf32>
    %c0_66 = arith.constant 0 : index
    %c0_67 = arith.constant 0 : index
    %96 = vector.load %arg18[%c0_66, %c0_67] : memref<32x50xf32, #tpu.memory_space<vmem>>, vector<32x50xf32>
    "tpu.trace_start"() <{level = 10 : i32, message = "btd,dv->btv"}> : () -> ()
    %cst_68 = arith.constant dense<0.000000e+00> : vector<2x8x50xf32>
    %97 = tpu.matmul %95, %96, %cst_68 {dimension_numbers = #tpu.dot_dimension_numbers<[2], [0], [0, 1], [1], [0, 0, 0, 1, 1, 1], [], []>} : vector<2x8x32xf32>, vector<32x50xf32>, vector<2x8x50xf32> -> vector<2x8x50xf32>
    "tpu.trace_stop"() : () -> ()
    %c0_69 = arith.constant 0 : index
    %c0_70 = arith.constant 0 : index
    %98 = vector.load %arg19[%c0_69, %c0_70] : memref<1x50xf32, #tpu.memory_space<vmem>>, vector<1x50xf32>
    %99 = vector.shape_cast %98 : vector<1x50xf32> to vector<1x1x50xf32>
    %100 = vector.broadcast %99 : vector<1x1x50xf32> to vector<2x8x50xf32>
    %101 = arith.addf %97, %100 : vector<2x8x50xf32>
    %c0_71 = arith.constant 0 : index
    %c0_72 = arith.constant 0 : index
    %c0_73 = arith.constant 0 : index
    %102 = vector.load %arg21[%c0_71, %c0_72, %c0_73] : memref<2x8x50xf32, #tpu.memory_space<vmem>>, vector<2x8x50xf32>
    tpu.vector_store %arg21[%c0_71, %c0_72, %c0_73], %101 {strides = array<i32>} : memref<2x8x50xf32, #tpu.memory_space<vmem>>, vector<2x8x50xf32>,
    %103 = vector.extract_strided_slice %7 {offsets = [0, 0], sizes = [2, 32], strides = [1, 1]} : vector<4x32xf32> to vector<2x32xf32>
    %104 = vector.extract_strided_slice %7 {offsets = [2, 0], sizes = [2, 32], strides = [1, 1]} : vector<4x32xf32> to vector<2x32xf32>
    %105 = arith.subf %75, %104 : vector<2x32xf32>
    %106 = math.absf %105 : vector<2x32xf32>
    %cst_74 = arith.constant 1.000000e+00 : f32
    %107 = vector.broadcast %cst_74 : f32 to vector<2x32xf32>
    %108 = arith.cmpf olt, %106, %107 : vector<2x32xf32>
    %cst_75 = arith.constant 5.000000e-01 : f32
    %109 = vector.broadcast %cst_75 : f32 to vector<2x32xf32>
    %110 = arith.mulf %109, %105 : vector<2x32xf32>
    %111 = arith.mulf %110, %105 : vector<2x32xf32>
    %cst_76 = arith.constant 5.000000e-01 : f32
    %112 = vector.broadcast %cst_76 : f32 to vector<2x32xf32>
    %113 = arith.subf %106, %112 : vector<2x32xf32>
    %114 = arith.select %108, %111, %113 : vector<2x32xi1>, vector<2x32xf32>
    %115 = vector.shape_cast %114 : vector<2x32xf32> to vector<1x2x32xf32>
    %cst_77 = arith.constant dense<0.000000e+00> : vector<1xf32>
    %116 = vector.multi_reduction <add>, %115, %cst_77 [1, 2] : vector<1x2x32xf32> to vector<1xf32>
    %117 = vector.shape_cast %116 : vector<1xf32> to vector<1x1x1xf32>
    %118 = vector.extract %117[0, 0, 0] : f32 from vector<1x1x1xf32>
    %cst_78 = arith.constant 6.400000e+01 : f32
    %119 = arith.divf %118, %cst_78 : f32
    %120 = arith.subf %76, %103 : vector<2x32xf32>
    %121 = math.absf %120 : vector<2x32xf32>
    %cst_79 = arith.constant 1.000000e+00 : f32
    %122 = vector.broadcast %cst_79 : f32 to vector<2x32xf32>
    %123 = arith.cmpf olt, %121, %122 : vector<2x32xf32>
    %cst_80 = arith.constant 5.000000e-01 : f32
    %124 = vector.broadcast %cst_80 : f32 to vector<2x32xf32>
    %125 = arith.mulf %124, %120 : vector<2x32xf32>
    %126 = arith.mulf %125, %120 : vector<2x32xf32>
    %cst_81 = arith.constant 5.000000e-01 : f32
    %127 = vector.broadcast %cst_81 : f32 to vector<2x32xf32>
    %128 = arith.subf %121, %127 : vector<2x32xf32>
    %129 = arith.select %123, %126, %128 : vector<2x32xi1>, vector<2x32xf32>
    %130 = vector.shape_cast %129 : vector<2x32xf32> to vector<1x2x32xf32>
    %cst_82 = arith.constant dense<0.000000e+00> : vector<1xf32>
    %131 = vector.multi_reduction <add>, %130, %cst_82 [1, 2] : vector<1x2x32xf32> to vector<1xf32>
    %132 = vector.shape_cast %131 : vector<1xf32> to vector<1x1x1xf32>
    %133 = vector.extract %132[0, 0, 0] : f32 from vector<1x1x1xf32>
    %cst_83 = arith.constant 6.400000e+01 : f32
    %134 = arith.divf %133, %cst_83 : f32
    %135 = arith.addf %119, %134 : f32
    %136 = vector.broadcast %135 : f32 to vector<1x1xf32>
    %c0_84 = arith.constant 0 : index
    %c0_85 = arith.constant 0 : index
    %137 = vector.load %arg22[%c0_84, %c0_85] : memref<1x1xf32, #tpu.memory_space<vmem>>, vector<1x1xf32>
    tpu.vector_store %arg22[%c0_84, %c0_85], %136 {strides = array<i32>} : memref<1x1xf32, #tpu.memory_space<vmem>>, vector<1x1xf32>,
    return
  }
}

</mosaic_0001>

<llo_original>
// kernel: dual_model_forward.1
$region0: #{dual_model_forward.1}
  #allocation0 [shape = 'u32[]', space=smem, size = 0x4, offset = 0x4, fixed_abs, tag = 'smem constant byte address 0x4 - core index']
  #allocation1 [shape = 'u32[144,128]{1,0:T(1,128)}', space=vmem, size = 0x12000, scoped, tag = 'internal scratch']
  #allocation2 [shape = 'f32[4,2,32]{2,1,0:T(2,128)}', space=vmem, size = 0x1000, scoped, tag = 'scratch operand']
  %s0 = inlined_call_operand.vmem [shape: f32[4,16,32], index: 0, kind: input, shape index: {}]
  %s1 = inlined_call_operand.vmem [shape: f32[4,64], index: 1, kind: input, shape index: {}]
  %s2 = inlined_call_operand.vmem [shape: f32[64,64], index: 2, kind: input, shape index: {}]
  %s3 = inlined_call_operand.vmem [shape: f32[4,64], index: 3, kind: input, shape index: {}]
  %s4 = inlined_call_operand.vmem [shape: f32[32,32], index: 4, kind: input, shape index: {}]
  %s5 = inlined_call_operand.vmem [shape: f32[2,32], index: 5, kind: input, shape index: {}]
  %s6 = inlined_call_operand.vmem [shape: f32[2,1], index: 6, kind: input, shape index: {}]
  %s7 = inlined_call_operand.vmem [shape: f32[2,32,32], index: 7, kind: input, shape index: {}]
  %s8 = inlined_call_operand.vmem [shape: f32[2,32], index: 8, kind: input, shape index: {}]
  %s9 = inlined_call_operand.vmem [shape: f32[64,96], index: 9, kind: input, shape index: {}]
  %s10 = inlined_call_operand.vmem [shape: f32[1,96], index: 10, kind: input, shape index: {}]
  %s11 = inlined_call_operand.vmem [shape: f32[32,96], index: 11, kind: input, shape index: {}]
  %s12 = inlined_call_operand.vmem [shape: f32[1,96], index: 12, kind: input, shape index: {}]
  %s13 = inlined_call_operand.vmem [shape: f32[32,20], index: 13, kind: input, shape index: {}]
  %s14 = inlined_call_operand.vmem [shape: f32[1,20], index: 14, kind: input, shape index: {}]
  %s15 = inlined_call_operand.vmem [shape: f32[32,32], index: 15, kind: input, shape index: {}]
  %s16 = inlined_call_operand.vmem [shape: f32[1,32], index: 16, kind: input, shape index: {}]
  %s17 = inlined_call_operand.vmem [shape: f32[2,8,32], index: 17, kind: input, shape index: {}]
  %s18 = inlined_call_operand.vmem [shape: f32[32,50], index: 18, kind: input, shape index: {}]
  %s19 = inlined_call_operand.vmem [shape: f32[1,50], index: 19, kind: input, shape index: {}]
  %s20 = inlined_call_operand.hbm [shape: f32[2,20], index: 20, kind: output, shape index: {0}]
  %s21 = inlined_call_operand.hbm [shape: f32[2,8,50], index: 21, kind: output, shape index: {1}]
  %s22 = inlined_call_operand.hbm [shape: f32[1,1], index: 22, kind: output, shape index: {2}]
  %23 = xla_tuple %s20, %s21, %s22
  %s24 = sld [smem:[#allocation0]]
  $region106: #{dual_model_forward.1} parent=0
    _
  %s26 = ssub.s32 1, %s24
  %s27 = scalar_select 0, %s26, %s24
  $region1: #{dual_model_forward.1} parent=0
    #allocation3 [shape = 'u8[1024]{0}', space=vmem, size = 0x400, scoped, tag = 'output window, operand 0, single buffered']
    #allocation4 [shape = 's32[1]{0}', space=sflag, size = 0x4, scoped, tag = 'scoped memory for dual_model_forward.1']
    #allocation5 [shape = 'u8[8192]{0}', space=vmem, size = 0x2000, scoped, tag = 'output window, operand 1, single buffered']
    #allocation6 [shape = 's32[1]{0}', space=sflag, size = 0x4, scoped, tag = 'scoped memory for dual_model_forward.1']
    #allocation7 [shape = 'u8[512]{0}', space=vmem, size = 0x400, scoped, tag = 'output window, operand 2, single buffered']
    %28 = vsyncpa [#allocation4], 0
    %29 = vsyncpa [#allocation6], 0
    // Predicated region
    $region2: #{dual_model_forward.1} parent=1 // pred_check
      _
    $region3: #{dual_model_forward.1} parent=1 // pred_check_branch
      %31 = sbr.rel (0) target = $region5
    $region4: #{dual_model_forward.1} parent=1 // pred_region
      _
    $region5: #{dual_model_forward.1} parent=1 // pred_fallthru
      _
    // Predicated region
    $region6: #{dual_model_forward.1} parent=1 // pred_check
      _
    $region7: #{dual_model_forward.1} parent=1 // pred_check_branch
      %33 = sbr.rel (0) target = $region9
    $region8: #{dual_model_forward.1} parent=1 // pred_region
      _
    $region9: #{dual_model_forward.1} parent=1 // pred_fallthru
      _
    // Predicated region
    $region10: #{dual_model_forward.1} parent=1 // pred_check
      _
    $region11: #{dual_model_forward.1} parent=1 // pred_check_branch
      %35 = sbr.rel (0) target = $region13
    $region12: #{dual_model_forward.1} parent=1 // pred_region
      _
    $region13: #{dual_model_forward.1} parent=1 // pred_fallthru
      _
    // Predicated region
    $region14: #{dual_model_forward.1} parent=1 // pred_check
      _
    $region15: #{dual_model_forward.1} parent=1 // pred_check_branch
      %37 = sbr.rel (0) target = $region17
    $region16: #{dual_model_forward.1} parent=1 // pred_region
      _
    $region17: #{dual_model_forward.1} parent=1 // pred_fallthru
      _
    // Predicated region
    $region18: #{dual_model_forward.1} parent=1 // pred_check
      _
    $region19: #{dual_model_forward.1} parent=1 // pred_check_branch
      %39 = sbr.rel (0) target = $region21
    $region20: #{dual_model_forward.1} parent=1 // pred_region
      _
    $region21: #{dual_model_forward.1} parent=1 // pred_fallthru
      _
    // Predicated region
    $region22: #{dual_model_forward.1} parent=1 // pred_check
      _
    $region23: #{dual_model_forward.1} parent=1 // pred_check_branch
      %41 = sbr.rel (0) target = $region25
    $region24: #{dual_model_forward.1} parent=1 // pred_region
      _
    $region25: #{dual_model_forward.1} parent=1 // pred_fallthru
      _
    // Predicated region
    $region26: #{dual_model_forward.1} parent=1 // pred_check
      _
    $region27: #{dual_model_forward.1} parent=1 // pred_check_branch
      %43 = sbr.rel (0) target = $region29
    $region28: #{dual_model_forward.1} parent=1 // pred_region
      _
    $region29: #{dual_model_forward.1} parent=1 // pred_fallthru
      _
    // Predicated region
    $region30: #{dual_model_forward.1} parent=1 // pred_check
      _
    $region31: #{dual_model_forward.1} parent=1 // pred_check_branch
      %45 = sbr.rel (0) target = $region33
    $region32: #{dual_model_forward.1} parent=1 // pred_region
      _
    $region33: #{dual_model_forward.1} parent=1 // pred_fallthru
      _
    // Predicated region
    $region34: #{dual_model_forward.1} parent=1 // pred_check
      _
    $region35: #{dual_model_forward.1} parent=1 // pred_check_branch
      %47 = sbr.rel (0) target = $region37
    $region36: #{dual_model_forward.1} parent=1 // pred_region
      _
    $region37: #{dual_model_forward.1} parent=1 // pred_fallthru
      _
    // Predicated region
    $region38: #{dual_model_forward.1} parent=1 // pred_check
      _
    $region39: #{dual_model_forward.1} parent=1 // pred_check_branch
      %49 = sbr.rel (0) target = $region41
    $region40: #{dual_model_forward.1} parent=1 // pred_region
      _
    $region41: #{dual_model_forward.1} parent=1 // pred_fallthru
      _
    // Predicated region
    $region42: #{dual_model_forward.1} parent=1 // pred_check
      _
    $region43: #{dual_model_forward.1} parent=1 // pred_check_branch
      %51 = sbr.rel (0) target = $region45
    $region44: #{dual_model_forward.1} parent=1 // pred_region
      _
    $region45: #{dual_model_forward.1} parent=1 // pred_fallthru
      _
    // Predicated region
    $region46: #{dual_model_forward.1} parent=1 // pred_check
      _
    $region47: #{dual_model_forward.1} parent=1 // pred_check_branch
      %53 = sbr.rel (0) target = $region49
    $region48: #{dual_model_forward.1} parent=1 // pred_region
      _
    $region49: #{dual_model_forward.1} parent=1 // pred_fallthru
      _
    // Predicated region
    $region50: #{dual_model_forward.1} parent=1 // pred_check
      _
    $region51: #{dual_model_forward.1} parent=1 // pred_check_branch
      %55 = sbr.rel (0) target = $region53
    $region52: #{dual_model_forward.1} parent=1 // pred_region
      _
    $region53: #{dual_model_forward.1} parent=1 // pred_fallthru
      _
    // Predicated region
    $region54: #{dual_model_forward.1} parent=1 // pred_check
      _
    $region55: #{dual_model_forward.1} parent=1 // pred_check_branch
      %57 = sbr.rel (0) target = $region57
    $region56: #{dual_model_forward.1} parent=1 // pred_region
      _
    $region57: #{dual_model_forward.1} parent=1 // pred_fallthru
      _
    // Predicated region
    $region58: #{dual_model_forward.1} parent=1 // pred_check
      _
    $region59: #{dual_model_forward.1} parent=1 // pred_check_branch
      %59 = sbr.rel (0) target = $region61
    $region60: #{dual_model_forward.1} parent=1 // pred_region
      _
    $region61: #{dual_model_forward.1} parent=1 // pred_fallthru
      _
    // Predicated region
    $region62: #{dual_model_forward.1} parent=1 // pred_check
      _
    $region63: #{dual_model_forward.1} parent=1 // pred_check_branch
      %61 = sbr.rel (0) target = $region65
    $region64: #{dual_model_forward.1} parent=1 // pred_region
      _
    $region65: #{dual_model_forward.1} parent=1 // pred_fallthru
      _
    // Predicated region
    $region66: #{dual_model_forward.1} parent=1 // pred_check
      _
    $region67: #{dual_model_forward.1} parent=1 // pred_check_branch
      %63 = sbr.rel (0) target = $region69
    $region68: #{dual_model_forward.1} parent=1 // pred_region
      _
    $region69: #{dual_model_forward.1} parent=1 // pred_fallthru
      _
    // Predicated region
    $region70: #{dual_model_forward.1} parent=1 // pred_check
      _
    $region71: #{dual_model_forward.1} parent=1 // pred_check_branch
      %65 = sbr.rel (0) target = $region73
    $region72: #{dual_model_forward.1} parent=1 // pred_region
      _
    $region73: #{dual_model_forward.1} parent=1 // pred_fallthru
      _
    // Predicated region
    $region74: #{dual_model_forward.1} parent=1 // pred_check
      _
    $region75: #{dual_model_forward.1} parent=1 // pred_check_branch
      %67 = sbr.rel (0) target = $region77
    $region76: #{dual_model_forward.1} parent=1 // pred_region
      _
    $region77: #{dual_model_forward.1} parent=1 // pred_fallthru
      _
    // Predicated region
    $region78: #{dual_model_forward.1} parent=1 // pred_check
      _
    $region79: #{dual_model_forward.1} parent=1 // pred_check_branch
      %69 = sbr.rel (0) target = $region81
    $region80: #{dual_model_forward.1} parent=1 // pred_region
      _
    $region81: #{dual_model_forward.1} parent=1 // pred_fallthru
      _
    %v70 = vld [vmem:[%s1] sm:$0xf]
    %v71 = vld [vmem:[%s2] sm:$0xff]
    %v72 = vld [vmem:[%s2 + $0x8] sm:$0xff]
    %v73 = vld [vmem:[%s2 + $0x10] sm:$0xff]
    %v74 = vld [vmem:[%s2 + $0x18] sm:$0xff]
    %v75 = vld [vmem:[%s2 + $0x20] sm:$0xff]
    %v76 = vld [vmem:[%s2 + $0x28] sm:$0xff]
    %v77 = vld [vmem:[%s2 + $0x30] sm:$0xff]
    %v78 = vld [vmem:[%s2 + $0x38] sm:$0xff]
    %v79 = vld [vmem:[%s3] sm:$0xf]
    %vm80 = vcmask 523264
    %v82 = vsel %vm80, %v70, 0
    %84 = vmatprep.subr.mxu0 0.0
    %85 = vmatpush1.msra.mxu0 %v71
    %86 = vmatprep.subr.mxu0 0.0
    %87 = vmatpush1.msra.mxu0 %v72
    %88 = vmatprep.subr.mxu0 0.0
    %89 = vmatpush1.msra.mxu0 %v73
    %90 = vmatprep.subr.mxu0 0.0
    %91 = vmatpush1.msra.mxu0 %v74
    %92 = vmatprep.subr.mxu0 0.0
    %93 = vmatpush1.msra.mxu0 %v75
    %94 = vmatprep.subr.mxu0 0.0
    %95 = vmatpush1.msra.mxu0 %v76
    %96 = vmatprep.subr.mxu0 0.0
    %97 = vmatpush1.msra.mxu0 %v77
    %98 = vmatprep.subr.mxu0 0.0
    %99 = vmatpush1.msra.mxu0 %v78
    %100 = vmatprep.subr.mxu0 0.0
    %101 = vmatpush1.msra.mxu0 0.0
    %102 = vmatprep.subr.mxu0 0.0
    %103 = vmatpush1.msra.mxu0 0.0
    %104 = vmatprep.subr.mxu0 0.0
    %105 = vmatpush1.msra.mxu0 0.0
    %106 = vmatprep.subr.mxu0 0.0
    %107 = vmatpush1.msra.mxu0 0.0
    %108 = vmatprep.subr.mxu0 0.0
    %109 = vmatpush1.msra.mxu0 0.0
    %110 = vmatprep.subr.mxu0 0.0
    %111 = vmatpush1.msra.mxu0 0.0
    %112 = vmatprep.subr.mxu0 0.0
    %113 = vmatpush1.msra.mxu0 0.0
    %114 = vmatprep.subr.mxu0 0.0
    %115 = vmatpush1.msra.mxu0 0.0
    %116 = vmatprep.subr.mxu0 0.0
    %117 = vmatpush1.msra.mxu0 0.0
    %118 = vmatprep.subr.mxu0 0.0
    %119 = vmatpush1.msra.mxu0 0.0
    %120 = vmatprep.subr.mxu0 0.0
    %121 = vmatpush1.msra.mxu0 0.0
    %122 = vmatprep.subr.mxu0 0.0
    %123 = vmatpush1.msra.mxu0 0.0
    %124 = vmatprep.subr.mxu0 0.0
    %125 = vmatpush1.msra.mxu0 0.0
    %126 = vmatprep.subr.mxu0 0.0
    %127 = vmatpush1.msra.mxu0 0.0
    %128 = vmatprep.subr.mxu0 0.0
    %129 = vmatpush1.msra.mxu0 0.0
    %130 = vmatprep.subr.mxu0 0.0
    %131 = vmatpush1.msra.mxu0 0.0
    %132 = vmatprep.subr.mxu0 0.0
    %133 = vmatpush1.msra.mxu0 0.0
    %134 = vmatprep.subr.mxu0 0.0
    %135 = vmatpush1.msra.mxu0 0.0
    %136 = vmatprep.subr.mxu0 0.0
    %137 = vmatpush1.msra.mxu0 0.0
    %138 = vmatprep.subr.mxu0 0.0
    %139 = vmatpush1.msra.mxu0 0.0
    %140 = vmatprep.subr.mxu0 0.0
    %141 = vmatpush1.msra.mxu0 0.0
    %142 = vmatprep.subr.mxu0 0.0
    %143 = vmatpush1.msra.mxu0 0.0
    %144 = vmatprep.subr.mxu0 0.0
    %145 = vmatpush1.msra.mxu0 0.0
    %146 = vmatprep.subr.mxu0 0.0
    %147 = vmatpush1.msra.mxu0 0.0
    %148 = vmatprep.mubr.f32.mxu0 0.0
    %149 = vmatmul.mubr.f32.gmra.mrb[0].mxu0 %v82
    %v150 = vpop.f32.mrb[0].mxu0
    %v151 = vadd.f32 %v79, %v150
    %v152 = vpop.f32.mrb[0].mxu0
    %153 = vdwg.mxu0
    %v154 = vtanh.pop %v151
    %v155 = vld [vmem:[%s0] sm:$0xff]
    %v156 = vld [vmem:[%s0 + $0x8] sm:$0xff]
    %v157 = vld [vmem:[%s0 + $0x10] sm:$0xff]
    %v158 = vld [vmem:[%s0 + $0x18] sm:$0xff]
    %v159 = vld [vmem:[%s0 + $0x20] sm:$0xff]
    %v160 = vld [vmem:[%s0 + $0x28] sm:$0xff]
    %v161 = vld [vmem:[%s0 + $0x30] sm:$0xff]
    %v162 = vld [vmem:[%s0 + $0x38] sm:$0xff]
    %v163 = vld [vmem:[%s4] sm:$0xff]
    %v164 = vld [vmem:[%s4 + $0x8] sm:$0xff]
    %v165 = vld [vmem:[%s4 + $0x10] sm:$0xff]
    %v166 = vld [vmem:[%s4 + $0x18] sm:$0xff]
    %vm167 = vcmask 261120
    %v169 = vsel %vm167, %v155, 0
    %v172 = vsel %vm167, %v156, 0
    %v175 = vsel %vm167, %v157, 0
    %v178 = vsel %vm167, %v158, 0
    %v181 = vsel %vm167, %v159, 0
    %v184 = vsel %vm167, %v160, 0
    %v187 = vsel %vm167, %v161, 0
    %v190 = vsel %vm167, %v162, 0
    %192 = vmatprep.subr.mxu0 0.0
    %193 = vmatpush1.msra.mxu0 %v163
    %194 = vmatprep.subr.mxu0 0.0
    %195 = vmatpush1.msra.mxu0 %v164
    %196 = vmatprep.subr.mxu0 0.0
    %197 = vmatpush1.msra.mxu0 %v165
    %198 = vmatprep.subr.mxu0 0.0
    %199 = vmatpush1.msra.mxu0 %v166
    %200 = vmatprep.subr.mxu0 0.0
    %201 = vmatpush1.msra.mxu0 0.0
    %202 = vmatprep.subr.mxu0 0.0
    %203 = vmatpush1.msra.mxu0 0.0
    %204 = vmatprep.subr.mxu0 0.0
    %205 = vmatpush1.msra.mxu0 0.0
    %206 = vmatprep.subr.mxu0 0.0
    %207 = vmatpush1.msra.mxu0 0.0
    %208 = vmatprep.subr.mxu0 0.0
    %209 = vmatpush1.msra.mxu0 0.0
    %210 = vmatprep.subr.mxu0 0.0
    %211 = vmatpush1.msra.mxu0 0.0
    %212 = vmatprep.subr.mxu0 0.0
    %213 = vmatpush1.msra.mxu0 0.0
    %214 = vmatprep.subr.mxu0 0.0
    %215 = vmatpush1.msra.mxu0 0.0
    %216 = vmatprep.subr.mxu0 0.0
    %217 = vmatpush1.msra.mxu0 0.0
    %218 = vmatprep.subr.mxu0 0.0
    %219 = vmatpush1.msra.mxu0 0.0
    %220 = vmatprep.subr.mxu0 0.0
    %221 = vmatpush1.msra.mxu0 0.0
    %222 = vmatprep.subr.mxu0 0.0
    %223 = vmatpush1.msra.mxu0 0.0
    %224 = vmatprep.subr.mxu0 0.0
    %225 = vmatpush1.msra.mxu0 0.0
    %226 = vmatprep.subr.mxu0 0.0
    %227 = vmatpush1.msra.mxu0 0.0
    %228 = vmatprep.subr.mxu0 0.0
    %229 = vmatpush1.msra.mxu0 0.0
    %230 = vmatprep.subr.mxu0 0.0
    %231 = vmatpush1.msra.mxu0 0.0
    %232 = vmatprep.subr.mxu0 0.0
    %233 = vmatpush1.msra.mxu0 0.0
    %234 = vmatprep.subr.mxu0 0.0
    %235 = vmatpush1.msra.mxu0 0.0
    %236 = vmatprep.subr.mxu0 0.0
    %237 = vmatpush1.msra.mxu0 0.0
    %238 = vmatprep.subr.mxu0 0.0
    %239 = vmatpush1.msra.mxu0 0.0
    %240 = vmatprep.subr.mxu0 0.0
    %241 = vmatpush1.msra.mxu0 0.0
    %242 = vmatprep.subr.mxu0 0.0
    %243 = vmatpush1.msra.mxu0 0.0
    %244 = vmatprep.subr.mxu0 0.0
    %245 = vmatpush1.msra.mxu0 0.0
    %246 = vmatprep.subr.mxu0 0.0
    %247 = vmatpush1.msra.mxu0 0.0
    %248 = vmatprep.subr.mxu0 0.0
    %249 = vmatpush1.msra.mxu0 0.0
    %250 = vmatprep.subr.mxu0 0.0
    %251 = vmatpush1.msra.mxu0 0.0
    %252 = vmatprep.subr.mxu0 0.0
    %253 = vmatpush1.msra.mxu0 0.0
    %254 = vmatprep.subr.mxu0 0.0
    %255 = vmatpush1.msra.mxu0 0.0
    %256 = vmatprep.mubr.f32.mxu0 0.0
    %257 = vmatmul.mubr.f32.gmra.mrb[0].mxu0 %v169
    %v258 = vpop.f32.mrb[0].mxu0
    %v259 = vadd.f32 0.0, %v258
    %v260 = vpop.f32.mrb[0].mxu0
    %261 = vmatprep.mubr.f32.mxu0 0.0
    %262 = vmatmul.mubr.f32.gmra.mrb[0].mxu0 %v172
    %v263 = vpop.f32.mrb[0].mxu0
    %v264 = vadd.f32 0.0, %v263
    %v265 = vpop.f32.mrb[0].mxu0
    %266 = vmatprep.mubr.f32.mxu0 0.0
    %267 = vmatmul.mubr.f32.gmra.mrb[0].mxu0 %v175
    %v268 = vpop.f32.mrb[0].mxu0
    %v269 = vadd.f32 0.0, %v268
    %v270 = vpop.f32.mrb[0].mxu0
    %271 = vmatprep.mubr.f32.mxu0 0.0
    %272 = vmatmul.mubr.f32.gmra.mrb[0].mxu0 %v178
    %v273 = vpop.f32.mrb[0].mxu0
    %v274 = vadd.f32 0.0, %v273
    %v275 = vpop.f32.mrb[0].mxu0
    %276 = vmatprep.mubr.f32.mxu0 0.0
    %277 = vmatmul.mubr.f32.gmra.mrb[0].mxu0 %v181
    %v278 = vpop.f32.mrb[0].mxu0
    %v279 = vadd.f32 0.0, %v278
    %v280 = vpop.f32.mrb[0].mxu0
    %281 = vmatprep.mubr.f32.mxu0 0.0
    %282 = vmatmul.mubr.f32.gmra.mrb[0].mxu0 %v184
    %v283 = vpop.f32.mrb[0].mxu0
    %v284 = vadd.f32 0.0, %v283
    %v285 = vpop.f32.mrb[0].mxu0
    %286 = vmatprep.mubr.f32.mxu0 0.0
    %287 = vmatmul.mubr.f32.gmra.mrb[0].mxu0 %v187
    %v288 = vpop.f32.mrb[0].mxu0
    %v289 = vadd.f32 0.0, %v288
    %v290 = vpop.f32.mrb[0].mxu0
    %291 = vmatprep.mubr.f32.mxu0 0.0
    %292 = vmatmul.mubr.f32.gmra.mrb[0].mxu0 %v190
    %v293 = vpop.f32.mrb[0].mxu0
    %v294 = vadd.f32 0.0, %v293
    %v295 = vpop.f32.mrb[0].mxu0
    %296 = vdwg.mxu0
    %v297 = vtanh.pop %v259
    %v298 = vtanh.pop %v264
    %v299 = vtanh.pop %v269
    %v300 = vtanh.pop %v274
    %v301 = vtanh.pop %v279
    %v302 = vtanh.pop %v284
    %v303 = vtanh.pop %v289
    %v304 = vtanh.pop %v294
    %v307 = vunpack.c.l.s4 1966171168
    %v308 = vunpack.c.0.s8 %v307
    %v309 = vlaneseq
    %v310 = vshrl.u32 %v309, 7
    %v311 = vsub.s32 %v308, %v310
    %v312 = vrot.slane %v154, %v311
    %v313 = vcombine.high %v312, %v312
    %v315 = vunpack.c.l.s4 1966171168
    %v316 = vunpack.c.0.s8 %v315
    %v317 = vlaneseq
    %v318 = vshrl.u32 %v317, 7
    %v319 = vsub.s32 %v316, %v318
    %v320 = vrot.slane %v312, %v319
    %v322 = vunpack.c.l.s4 1966171168
    %v323 = vunpack.c.0.s8 %v322
    %v324 = vlaneseq
    %v325 = vshrl.u32 %v324, 7
    %v326 = vsub.s32 %v323, %v325
    %v327 = vrot.slane %v313, %v326
    %v328 = vcombine.high %v320, %v320
    %v329 = vcombine.high %v327, %v327
    %v330 = vlaneseq
    %v331 = vshrl.u32 %v330, 7
    %v332 = vsub.s32 0, %v331
    %v333 = vrot.slane %v320, %v332
    %v334 = vlaneseq
    %v335 = vshrl.u32 %v334, 7
    %v336 = vsub.s32 0, %v335
    %v337 = vrot.slane %v327, %v336
    %v338 = vlaneseq
    %v339 = vshrl.u32 %v338, 7
    %v340 = vsub.s32 0, %v339
    %v341 = vrot.slane %v328, %v340
    %v342 = vlaneseq
    %v343 = vshrl.u32 %v342, 7
    %v344 = vsub.s32 0, %v343
    %v345 = vrot.slane %v329, %v344
    %v350 = vmul.f32 %v297, %v333
    %v351 = vmul.f32 %v298, %v333
    %v352 = vmul.f32 %v299, %v337
    %v353 = vmul.f32 %v300, %v337
    %v354 = vmul.f32 %v301, %v341
    %v355 = vmul.f32 %v302, %v341
    %v356 = vmul.f32 %v303, %v345
    %v357 = vmul.f32 %v304, %v345
    %v358 = vld [vmem:[%s5] sm:$0x3]
    %v360 = vunpack.c.l.s4 1983009808
    %v361 = vunpack.c.0.s8 %v360
    %v362 = vlaneseq
    %v363 = vshrl.u32 %v362, 7
    %v364 = vsub.s32 %v361, %v363
    %v365 = vcombine.low 0.0, 0.0
    %v366 = vcombine.high 0.0, 0.0
    %v368 = vunpack.c.l.s4 1934713408
    %v369 = vunpack.c.0.s8 %v368
    %v370 = vlaneseq
    %v371 = vshrl.u32 %v370, 7
    %v372 = vsub.s32 %v369, %v371
    %v373 = vrot.slane %v365, %v372
    %v375 = vunpack.c.l.s4 1934713408
    %v376 = vunpack.c.0.s8 %v375
    %v377 = vlaneseq
    %v378 = vshrl.u32 %v377, 7
    %v379 = vsub.s32 %v376, %v378
    %v380 = vrot.slane %v366, %v379
    %v381 = vcombine.high %v373, 0.0
    %v382 = vcombine.high %v380, 0.0
    %384 = vrot.lane.b32.xlu0 %v381, 16
    %v385 = vpop.permute.xlu0 %384
    %388 = vrot.lane.b32.xlu0 %v380, 32
    %v389 = vpop.permute.xlu0 %388
    %392 = vrot.lane.b32.xlu0 %v382, 48
    %v393 = vpop.permute.xlu0 %392
    %vm395 = vcmask 130048
    %v396 = vsel %vm395, %v373, %v385
    %v397 = vsel %vm167, %v396, %v389
    %vm398 = vcmask 392192
    %v399 = vsel %vm398, %v397, %v393
    %v401 = vsel %vm167, %v358, 0
    %v404 = vsel %vm167, %v350, 0
    %v407 = vsel %vm167, %v351, 0
    %v410 = vsel %vm167, %v352, 0
    %v413 = vsel %vm167, %v353, 0
    %v416 = vsel %vm167, %v354, 0
    %v419 = vsel %vm167, %v355, 0
    %v422 = vsel %vm167, %v356, 0
    %v425 = vsel %vm167, %v357, 0
    %427 = vmatprep.subr.mxu0 0.0
    %428 = vmatpush1.xpose.msra.mxu0 %v404
    %429 = vmatprep.subr.mxu0 0.0
    %430 = vmatpush1.xpose.msra.mxu0 %v407
    %431 = vmatprep.subr.mxu0 0.0
    %432 = vmatpush1.xpose.msra.mxu0 %v410
    %433 = vmatprep.subr.mxu0 0.0
    %434 = vmatpush1.xpose.msra.mxu0 %v413
    %435 = vmatprep.subr.mxu0 0.0
    %436 = vmatpush1.xpose.msra.mxu0 %v416
    %437 = vmatprep.subr.mxu0 0.0
    %438 = vmatpush1.xpose.msra.mxu0 %v419
    %439 = vmatprep.subr.mxu0 0.0
    %440 = vmatpush1.xpose.msra.mxu0 %v422
    %441 = vmatprep.subr.mxu0 0.0
    %442 = vmatpush1.xpose.msra.mxu0 %v425
    %443 = vmatprep.subr.mxu0 0.0
    %444 = vmatpush1.xpose.msra.mxu0 0.0
    %445 = vmatprep.subr.mxu0 0.0
    %446 = vmatpush1.xpose.msra.mxu0 0.0
    %447 = vmatprep.subr.mxu0 0.0
    %448 = vmatpush1.xpose.msra.mxu0 0.0
    %449 = vmatprep.subr.mxu0 0.0
    %450 = vmatpush1.xpose.msra.mxu0 0.0
    %451 = vmatprep.subr.mxu0 0.0
    %452 = vmatpush1.xpose.msra.mxu0 0.0
    %453 = vmatprep.subr.mxu0 0.0
    %454 = vmatpush1.xpose.msra.mxu0 0.0
    %455 = vmatprep.subr.mxu0 0.0
    %456 = vmatpush1.xpose.msra.mxu0 0.0
    %457 = vmatprep.subr.mxu0 0.0
    %458 = vmatpush1.xpose.msra.mxu0 0.0
    %459 = vmatprep.subr.mxu0 0.0
    %460 = vmatpush1.xpose.msra.mxu0 0.0
    %461 = vmatprep.subr.mxu0 0.0
    %462 = vmatpush1.xpose.msra.mxu0 0.0
    %463 = vmatprep.subr.mxu0 0.0
    %464 = vmatpush1.xpose.msra.mxu0 0.0
    %465 = vmatprep.subr.mxu0 0.0
    %466 = vmatpush1.xpose.msra.mxu0 0.0
    %467 = vmatprep.subr.mxu0 0.0
    %468 = vmatpush1.xpose.msra.mxu0 0.0
    %469 = vmatprep.subr.mxu0 0.0
    %470 = vmatpush1.xpose.msra.mxu0 0.0
    %471 = vmatprep.subr.mxu0 0.0
    %472 = vmatpush1.xpose.msra.mxu0 0.0
    %473 = vmatprep.subr.mxu0 0.0
    %474 = vmatpush1.xpose.msra.mxu0 0.0
    %475 = vmatprep.subr.mxu0 0.0
    %476 = vmatpush1.xpose.msra.mxu0 0.0
    %477 = vmatprep.subr.mxu0 0.0
    %478 = vmatpush1.xpose.msra.mxu0 0.0
    %479 = vmatprep.subr.mxu0 0.0
    %480 = vmatpush1.xpose.msra.mxu0 0.0
    %481 = vmatprep.subr.mxu0 0.0
    %482 = vmatpush1.xpose.msra.mxu0 0.0
    %483 = vmatprep.subr.mxu0 0.0
    %484 = vmatpush1.xpose.msra.mxu0 0.0
    %485 = vmatprep.subr.mxu0 0.0
    %486 = vmatpush1.xpose.msra.mxu0 0.0
    %487 = vmatprep.subr.mxu0 0.0
    %488 = vmatpush1.xpose.msra.mxu0 0.0
    %489 = vmatprep.subr.mxu0 0.0
    %490 = vmatpush1.xpose.msra.mxu0 0.0
    %491 = vmatprep.mubr.f32.mxu0 0.0
    %492 = vmatmul.mubr.f32.gmra.mrb[0].mxu0 %v401
    %v493 = vpop.f32.mrb[0].mxu0
    %v494 = vadd.f32 %v399, %v493
    %v495 = vpop.f32.mrb[0].mxu0
    %496 = vdwg.mxu0
    %498 = vrot.lane.b32.xlu0 %v494, 112
    %v499 = vpop.permute.xlu0 %498
    %501 = vrot.lane.b32.xlu0 %v494, 96
    %v502 = vpop.permute.xlu0 %501
    %504 = vrot.lane.b32.xlu0 %v494, 80
    %v505 = vpop.permute.xlu0 %504
    %v507 = vcombine.low %v494, %v502
    %v509 = vunpack.c.l.s4 1983009808
    %v510 = vunpack.c.0.s8 %v509
    %v511 = vlaneseq
    %v512 = vshrl.u32 %v511, 7
    %v513 = vsub.s32 %v510, %v512
    %v514 = vrot.slane %v507, %v513
    %v515 = vcombine.low %v499, %v505
    %v517 = vunpack.c.l.s4 1983009808
    %v518 = vunpack.c.0.s8 %v517
    %v519 = vlaneseq
    %v520 = vshrl.u32 %v519, 7
    %v521 = vsub.s32 %v518, %v520
    %v522 = vrot.slane %v515, %v521
    %v523 = vcombine.low %v514, %v522
    %v525 = vunpack.c.l.s4 1934713408
    %v526 = vunpack.c.0.s8 %v525
    %v527 = vlaneseq
    %v528 = vshrl.u32 %v527, 7
    %v529 = vsub.s32 %v526, %v528
    %v530 = vrot.slane %v523, %v529
    %v532 = vunpack.c.l.s4 1983009808
    %v533 = vunpack.c.0.s8 %v532
    %v534 = vlaneseq
    %v535 = vshrl.u32 %v534, 7
    %v536 = vsub.s32 %v533, %v535
    %v537 = vrot.slane %v530, %v536
    %v538 = vcombine.high %v530, 0.0
    %v540 = vunpack.c.l.s4 1983009808
    %v541 = vunpack.c.0.s8 %v540
    %v542 = vlaneseq
    %v543 = vshrl.u32 %v542, 7
    %v544 = vsub.s32 %v541, %v543
    %v545 = vrot.slane %v538, %v544
    %v546 = vcombine.low %v537, %v545
    %v547 = vcombine.high %v537, %v545
    %v549 = vunpack.c.l.s4 1934713408
    %v550 = vunpack.c.0.s8 %v549
    %v551 = vlaneseq
    %v552 = vshrl.u32 %v551, 7
    %v553 = vsub.s32 %v550, %v552
    %v554 = vrot.slane %v546, %v553
    %v556 = vunpack.c.l.s4 1934713408
    %v557 = vunpack.c.0.s8 %v556
    %v558 = vlaneseq
    %v559 = vshrl.u32 %v558, 7
    %v560 = vsub.s32 %v557, %v559
    %v561 = vrot.slane %v547, %v560
    %v562 = vcombine.high %v554, 0.0
    %v563 = vcombine.high %v561, 0.0
    %v564 = vld [vmem:[%s6] sm:$0x3]
    %566 = vset.pattern.permute.xlu0 0
    %567 = vperm.xlu0 %566, %v564
    %v568 = vpop.permute.xlu0 %567
    %v570 = vadd.f32 %v554, %v568
    %v571 = vadd.f32 %v562, %v568
    %v572 = vadd.f32 %v561, %v568
    %v573 = vadd.f32 %v563, %v568
    %vm574 = vcmask 123904
    %v575 = vsel %vm574, %v570, -inf
    %576 = vmax.xlane.f32.xlu0 %v575
    %v577 = vpop.xlane.xlu0 %576
    %v578 = vsel %vm574, %v571, -inf
    %579 = vmax.xlane.f32.xlu0 %v578
    %v580 = vpop.xlane.xlu0 %579
    %v581 = vsel %vm574, %v572, -inf
    %582 = vmax.xlane.f32.xlu0 %v581
    %v583 = vpop.xlane.xlu0 %582
    %v584 = vsel %vm574, %v573, -inf
    %585 = vmax.xlane.f32.xlu0 %v584
    %v586 = vpop.xlane.xlu0 %585
    %v587 = vsub.f32 %v570, %v577
    %v588 = vsub.f32 %v571, %v580
    %v589 = vsub.f32 %v572, %v583
    %v590 = vsub.f32 %v573, %v586
    %v591 = vmul.f32 %v587, 1.442695
    %v592 = vpow.pop %v591
    %v593 = vmul.f32 %v588, 1.442695
    %v594 = vpow.pop %v593
    %v595 = vmul.f32 %v589, 1.442695
    %v596 = vpow.pop %v595
    %v597 = vmul.f32 %v590, 1.442695
    %v598 = vpow.pop %v597
    %v599 = vsel %vm574, %v592, 0.0
    %600 = vadd.xlane.f32.xlu0 %v599
    %v601 = vpop.xlane.xlu0 %600
    %v602 = vsel %vm574, %v594, 0.0
    %603 = vadd.xlane.f32.xlu0 %v602
    %v604 = vpop.xlane.xlu0 %603
    %v605 = vsel %vm574, %v596, 0.0
    %606 = vadd.xlane.f32.xlu0 %v605
    %v607 = vpop.xlane.xlu0 %606
    %v608 = vsel %vm574, %v598, 0.0
    %609 = vadd.xlane.f32.xlu0 %v608
    %v610 = vpop.xlane.xlu0 %609
    %v611 = vrcp.pop %v601
    %v612 = vrcp.pop %v604
    %v613 = vrcp.pop %v607
    %v614 = vrcp.pop %v610
    %v615 = vmul.f32 %v592, %v611
    %v616 = vmul.f32 %v594, %v612
    %v617 = vmul.f32 %v596, %v613
    %v618 = vmul.f32 %v598, %v614
    %v620 = vsel %vm395, %v615, 0
    %622 = vmatprep.subr.mxu0 0.0
    %623 = vmatpush1.msra.mxu0 %v155
    %624 = vmatprep.subr.mxu0 0.0
    %625 = vmatpush1.msra.mxu0 %v156
    %626 = vmatprep.subr.mxu0 0.0
    %627 = vmatpush1.msra.mxu0 0.0
    %628 = vmatprep.subr.mxu0 0.0
    %629 = vmatpush1.msra.mxu0 0.0
    %630 = vmatprep.subr.mxu0 0.0
    %631 = vmatpush1.msra.mxu0 0.0
    %632 = vmatprep.subr.mxu0 0.0
    %633 = vmatpush1.msra.mxu0 0.0
    %634 = vmatprep.subr.mxu0 0.0
    %635 = vmatpush1.msra.mxu0 0.0
    %636 = vmatprep.subr.mxu0 0.0
    %637 = vmatpush1.msra.mxu0 0.0
    %638 = vmatprep.subr.mxu0 0.0
    %639 = vmatpush1.msra.mxu0 0.0
    %640 = vmatprep.subr.mxu0 0.0
    %641 = vmatpush1.msra.mxu0 0.0
    %642 = vmatprep.subr.mxu0 0.0
    %643 = vmatpush1.msra.mxu0 0.0
    %644 = vmatprep.subr.mxu0 0.0
    %645 = vmatpush1.msra.mxu0 0.0
    %646 = vmatprep.subr.mxu0 0.0
    %647 = vmatpush1.msra.mxu0 0.0
    %648 = vmatprep.subr.mxu0 0.0
    %649 = vmatpush1.msra.mxu0 0.0
    %650 = vmatprep.subr.mxu0 0.0
    %651 = vmatpush1.msra.mxu0 0.0
    %652 = vmatprep.subr.mxu0 0.0
    %653 = vmatpush1.msra.mxu0 0.0
    %654 = vmatprep.subr.mxu0 0.0
    %655 = vmatpush1.msra.mxu0 0.0
    %656 = vmatprep.subr.mxu0 0.0
    %657 = vmatpush1.msra.mxu0 0.0
    %658 = vmatprep.subr.mxu0 0.0
    %659 = vmatpush1.msra.mxu0 0.0
    %660 = vmatprep.subr.mxu0 0.0
    %661 = vmatpush1.msra.mxu0 0.0
    %662 = vmatprep.subr.mxu0 0.0
    %663 = vmatpush1.msra.mxu0 0.0
    %664 = vmatprep.subr.mxu0 0.0
    %665 = vmatpush1.msra.mxu0 0.0
    %666 = vmatprep.subr.mxu0 0.0
    %667 = vmatpush1.msra.mxu0 0.0
    %668 = vmatprep.subr.mxu0 0.0
    %669 = vmatpush1.msra.mxu0 0.0
    %670 = vmatprep.subr.mxu0 0.0
    %671 = vmatpush1.msra.mxu0 0.0
    %672 = vmatprep.subr.mxu0 0.0
    %673 = vmatpush1.msra.mxu0 0.0
    %674 = vmatprep.subr.mxu0 0.0
    %675 = vmatpush1.msra.mxu0 0.0
    %676 = vmatprep.subr.mxu0 0.0
    %677 = vmatpush1.msra.mxu0 0.0
    %678 = vmatprep.subr.mxu0 0.0
    %679 = vmatpush1.msra.mxu0 0.0
    %680 = vmatprep.subr.mxu0 0.0
    %681 = vmatpush1.msra.mxu0 0.0
    %682 = vmatprep.subr.mxu0 0.0
    %683 = vmatpush1.msra.mxu0 0.0
    %684 = vmatprep.subr.mxu0 0.0
    %685 = vmatpush1.msra.mxu0 0.0
    %686 = vmatprep.mubr.f32.mxu0 0.0
    %687 = vmatmul.mubr.f32.gmra.mrb[0].mxu0 %v620
    %v688 = vpop.f32.mrb[0].mxu0
    %v689 = vadd.f32 0.0, %v688
    %v690 = vpop.f32.mrb[0].mxu0
    %691 = vdwg.mxu0
    %v693 = vsel %vm395, %v616, 0
    %695 = vmatprep.subr.mxu0 0.0
    %696 = vmatpush1.msra.mxu0 %v157
    %697 = vmatprep.subr.mxu0 0.0
    %698 = vmatpush1.msra.mxu0 %v158
    %699 = vmatprep.subr.mxu0 0.0
    %700 = vmatpush1.msra.mxu0 0.0
    %701 = vmatprep.subr.mxu0 0.0
    %702 = vmatpush1.msra.mxu0 0.0
    %703 = vmatprep.subr.mxu0 0.0
    %704 = vmatpush1.msra.mxu0 0.0
    %705 = vmatprep.subr.mxu0 0.0
    %706 = vmatpush1.msra.mxu0 0.0
    %707 = vmatprep.subr.mxu0 0.0
    %708 = vmatpush1.msra.mxu0 0.0
    %709 = vmatprep.subr.mxu0 0.0
    %710 = vmatpush1.msra.mxu0 0.0
    %711 = vmatprep.subr.mxu0 0.0
    %712 = vmatpush1.msra.mxu0 0.0
    %713 = vmatprep.subr.mxu0 0.0
    %714 = vmatpush1.msra.mxu0 0.0
    %715 = vmatprep.subr.mxu0 0.0
    %716 = vmatpush1.msra.mxu0 0.0
    %717 = vmatprep.subr.mxu0 0.0
    %718 = vmatpush1.msra.mxu0 0.0
    %719 = vmatprep.subr.mxu0 0.0
    %720 = vmatpush1.msra.mxu0 0.0
    %721 = vmatprep.subr.mxu0 0.0
    %722 = vmatpush1.msra.mxu0 0.0
    %723 = vmatprep.subr.mxu0 0.0
    %724 = vmatpush1.msra.mxu0 0.0
    %725 = vmatprep.subr.mxu0 0.0
    %726 = vmatpush1.msra.mxu0 0.0
    %727 = vmatprep.subr.mxu0 0.0
    %728 = vmatpush1.msra.mxu0 0.0
    %729 = vmatprep.subr.mxu0 0.0
    %730 = vmatpush1.msra.mxu0 0.0
    %731 = vmatprep.subr.mxu0 0.0
    %732 = vmatpush1.msra.mxu0 0.0
    %733 = vmatprep.subr.mxu0 0.0
    %734 = vmatpush1.msra.mxu0 0.0
    %735 = vmatprep.subr.mxu0 0.0
    %736 = vmatpush1.msra.mxu0 0.0
    %737 = vmatprep.subr.mxu0 0.0
    %738 = vmatpush1.msra.mxu0 0.0
    %739 = vmatprep.subr.mxu0 0.0
    %740 = vmatpush1.msra.mxu0 0.0
    %741 = vmatprep.subr.mxu0 0.0
    %742 = vmatpush1.msra.mxu0 0.0
    %743 = vmatprep.subr.mxu0 0.0
    %744 = vmatpush1.msra.mxu0 0.0
    %745 = vmatprep.subr.mxu0 0.0
    %746 = vmatpush1.msra.mxu0 0.0
    %747 = vmatprep.subr.mxu0 0.0
    %748 = vmatpush1.msra.mxu0 0.0
    %749 = vmatprep.subr.mxu0 0.0
    %750 = vmatpush1.msra.mxu0 0.0
    %751 = vmatprep.subr.mxu0 0.0
    %752 = vmatpush1.msra.mxu0 0.0
    %753 = vmatprep.subr.mxu0 0.0
    %754 = vmatpush1.msra.mxu0 0.0
    %755 = vmatprep.subr.mxu0 0.0
    %756 = vmatpush1.msra.mxu0 0.0
    %757 = vmatprep.subr.mxu0 0.0
    %758 = vmatpush1.msra.mxu0 0.0
    %759 = vmatprep.mubr.f32.mxu0 0.0
    %760 = vmatmul.mubr.f32.gmra.mrb[0].mxu0 %v693
    %v761 = vpop.f32.mrb[0].mxu0
    %v762 = vadd.f32 0.0, %v761
    %v763 = vpop.f32.mrb[0].mxu0
    %764 = vdwg.mxu0
    %v766 = vsel %vm395, %v617, 0
    %768 = vmatprep.subr.mxu0 0.0
    %769 = vmatpush1.msra.mxu0 %v159
    %770 = vmatprep.subr.mxu0 0.0
    %771 = vmatpush1.msra.mxu0 %v160
    %772 = vmatprep.subr.mxu0 0.0
    %773 = vmatpush1.msra.mxu0 0.0
    %774 = vmatprep.subr.mxu0 0.0
    %775 = vmatpush1.msra.mxu0 0.0
    %776 = vmatprep.subr.mxu0 0.0
    %777 = vmatpush1.msra.mxu0 0.0
    %778 = vmatprep.subr.mxu0 0.0
    %779 = vmatpush1.msra.mxu0 0.0
    %780 = vmatprep.subr.mxu0 0.0
    %781 = vmatpush1.msra.mxu0 0.0
    %782 = vmatprep.subr.mxu0 0.0
    %783 = vmatpush1.msra.mxu0 0.0
    %784 = vmatprep.subr.mxu0 0.0
    %785 = vmatpush1.msra.mxu0 0.0
    %786 = vmatprep.subr.mxu0 0.0
    %787 = vmatpush1.msra.mxu0 0.0
    %788 = vmatprep.subr.mxu0 0.0
    %789 = vmatpush1.msra.mxu0 0.0
    %790 = vmatprep.subr.mxu0 0.0
    %791 = vmatpush1.msra.mxu0 0.0
    %792 = vmatprep.subr.mxu0 0.0
    %793 = vmatpush1.msra.mxu0 0.0
    %794 = vmatprep.subr.mxu0 0.0
    %795 = vmatpush1.msra.mxu0 0.0
    %796 = vmatprep.subr.mxu0 0.0
    %797 = vmatpush1.msra.mxu0 0.0
    %798 = vmatprep.subr.mxu0 0.0
    %799 = vmatpush1.msra.mxu0 0.0
    %800 = vmatprep.subr.mxu0 0.0
    %801 = vmatpush1.msra.mxu0 0.0
    %802 = vmatprep.subr.mxu0 0.0
    %803 = vmatpush1.msra.mxu0 0.0
    %804 = vmatprep.subr.mxu0 0.0
    %805 = vmatpush1.msra.mxu0 0.0
    %806 = vmatprep.subr.mxu0 0.0
    %807 = vmatpush1.msra.mxu0 0.0
    %808 = vmatprep.subr.mxu0 0.0
    %809 = vmatpush1.msra.mxu0 0.0
    %810 = vmatprep.subr.mxu0 0.0
    %811 = vmatpush1.msra.mxu0 0.0
    %812 = vmatprep.subr.mxu0 0.0
    %813 = vmatpush1.msra.mxu0 0.0
    %814 = vmatprep.subr.mxu0 0.0
    %815 = vmatpush1.msra.mxu0 0.0
    %816 = vmatprep.subr.mxu0 0.0
    %817 = vmatpush1.msra.mxu0 0.0
    %818 = vmatprep.subr.mxu0 0.0
    %819 = vmatpush1.msra.mxu0 0.0
    %820 = vmatprep.subr.mxu0 0.0
    %821 = vmatpush1.msra.mxu0 0.0
    %822 = vmatprep.subr.mxu0 0.0
    %823 = vmatpush1.msra.mxu0 0.0
    %824 = vmatprep.subr.mxu0 0.0
    %825 = vmatpush1.msra.mxu0 0.0
    %826 = vmatprep.subr.mxu0 0.0
    %827 = vmatpush1.msra.mxu0 0.0
    %828 = vmatprep.subr.mxu0 0.0
    %829 = vmatpush1.msra.mxu0 0.0
    %830 = vmatprep.subr.mxu0 0.0
    %831 = vmatpush1.msra.mxu0 0.0
    %832 = vmatprep.mubr.f32.mxu0 0.0
    %833 = vmatmul.mubr.f32.gmra.mrb[0].mxu0 %v766
    %v834 = vpop.f32.mrb[0].mxu0
    %v835 = vadd.f32 0.0, %v834
    %v836 = vpop.f32.mrb[0].mxu0
    %837 = vdwg.mxu0
    %v839 = vsel %vm395, %v618, 0
    %841 = vmatprep.subr.mxu0 0.0
    %842 = vmatpush1.msra.mxu0 %v161
    %843 = vmatprep.subr.mxu0 0.0
    %844 = vmatpush1.msra.mxu0 %v162
    %845 = vmatprep.subr.mxu0 0.0
    %846 = vmatpush1.msra.mxu0 0.0
    %847 = vmatprep.subr.mxu0 0.0
    %848 = vmatpush1.msra.mxu0 0.0
    %849 = vmatprep.subr.mxu0 0.0
    %850 = vmatpush1.msra.mxu0 0.0
    %851 = vmatprep.subr.mxu0 0.0
    %852 = vmatpush1.msra.mxu0 0.0
    %853 = vmatprep.subr.mxu0 0.0
    %854 = vmatpush1.msra.mxu0 0.0
    %855 = vmatprep.subr.mxu0 0.0
    %856 = vmatpush1.msra.mxu0 0.0
    %857 = vmatprep.subr.mxu0 0.0
    %858 = vmatpush1.msra.mxu0 0.0
    %859 = vmatprep.subr.mxu0 0.0
    %860 = vmatpush1.msra.mxu0 0.0
    %861 = vmatprep.subr.mxu0 0.0
    %862 = vmatpush1.msra.mxu0 0.0
    %863 = vmatprep.subr.mxu0 0.0
    %864 = vmatpush1.msra.mxu0 0.0
    %865 = vmatprep.subr.mxu0 0.0
    %866 = vmatpush1.msra.mxu0 0.0
    %867 = vmatprep.subr.mxu0 0.0
    %868 = vmatpush1.msra.mxu0 0.0
    %869 = vmatprep.subr.mxu0 0.0
    %870 = vmatpush1.msra.mxu0 0.0
    %871 = vmatprep.subr.mxu0 0.0
    %872 = vmatpush1.msra.mxu0 0.0
    %873 = vmatprep.subr.mxu0 0.0
    %874 = vmatpush1.msra.mxu0 0.0
    %875 = vmatprep.subr.mxu0 0.0
    %876 = vmatpush1.msra.mxu0 0.0
    %877 = vmatprep.subr.mxu0 0.0
    %878 = vmatpush1.msra.mxu0 0.0
    %879 = vmatprep.subr.mxu0 0.0
    %880 = vmatpush1.msra.mxu0 0.0
    %881 = vmatprep.subr.mxu0 0.0
    %882 = vmatpush1.msra.mxu0 0.0
    %883 = vmatprep.subr.mxu0 0.0
    %884 = vmatpush1.msra.mxu0 0.0
    %885 = vmatprep.subr.mxu0 0.0
    %886 = vmatpush1.msra.mxu0 0.0
    %887 = vmatprep.subr.mxu0 0.0
    %888 = vmatpush1.msra.mxu0 0.0
    %889 = vmatprep.subr.mxu0 0.0
    %890 = vmatpush1.msra.mxu0 0.0
    %891 = vmatprep.subr.mxu0 0.0
    %892 = vmatpush1.msra.mxu0 0.0
    %893 = vmatprep.subr.mxu0 0.0
    %894 = vmatpush1.msra.mxu0 0.0
    %895 = vmatprep.subr.mxu0 0.0
    %896 = vmatpush1.msra.mxu0 0.0
    %897 = vmatprep.subr.mxu0 0.0
    %898 = vmatpush1.msra.mxu0 0.0
    %899 = vmatprep.subr.mxu0 0.0
    %900 = vmatpush1.msra.mxu0 0.0
    %901 = vmatprep.subr.mxu0 0.0
    %902 = vmatpush1.msra.mxu0 0.0
    %903 = vmatprep.subr.mxu0 0.0
    %904 = vmatpush1.msra.mxu0 0.0
    %905 = vmatprep.mubr.f32.mxu0 0.0
    %906 = vmatmul.mubr.f32.gmra.mrb[0].mxu0 %v839
    %v907 = vpop.f32.mrb[0].mxu0
    %v908 = vadd.f32 0.0, %v907
    %v909 = vpop.f32.mrb[0].mxu0
    %910 = vdwg.mxu0
    %vm911 = vcmask 254976
    %912 = vst.msk [vmem:[#allocation2] sm:$0x3] %vm911, %v689
    %913 = vst.msk [vmem:[#allocation2 + $0x2] sm:$0x3] %vm911, %v762
    %914 = vst.msk [vmem:[#allocation2 + $0x4] sm:$0x3] %vm911, %v835
    %915 = vst.msk [vmem:[#allocation2 + $0x6] sm:$0x3] %vm911, %v908
    %v916 = vld [vmem:[%s10] sm:$0x1]
    %v917 = vld [vmem:[#allocation2] sm:$0x1]
    %v918 = vld [vmem:[#allocation2 + $0x2] sm:$0x1]
    %v919 = vld [vmem:[#allocation2 + $0x4] sm:$0x1]
    %v920 = vld [vmem:[#allocation2 + $0x6] sm:$0x1]
    %v921 = vld [vmem:[%s7] sm:$0xff]
    %v922 = vld [vmem:[%s7 + $0x8] sm:$0xff]
    %v923 = vld [vmem:[%s7 + $0x10] sm:$0xff]
    %v924 = vld [vmem:[%s7 + $0x18] sm:$0xff]
    %v925 = vld [vmem:[%s8] sm:$0x1]
    %v926 = vlaneseq
    %v927 = vshrl.u32 %v926, 7
    %v928 = vsub.s32 0, %v927
    %v929 = vrot.slane %v925, %v928
    %v934 = vrot.slane %v918, 7
    %vm935 = vcmask 1041409
    %v936 = vsel %vm935, %v934, %v917
    %v937 = vrot.slane %v919, 6
    %vm938 = vcmask 1042434
    %v939 = vsel %vm938, %v937, %v936
    %v940 = vrot.slane %v920, 5
    %vm941 = vcmask 1043459
    %v942 = vsel %vm941, %v940, %v939
    %v943 = vsel %vm167, %v942, 0
    %945 = vmatprep.subr.mxu0 0.0
    %946 = vmatpush1.msra.mxu0 %v921
    %947 = vmatprep.subr.mxu0 0.0
    %948 = vmatpush1.msra.mxu0 %v922
    %949 = vmatprep.subr.mxu0 0.0
    %950 = vmatpush1.msra.mxu0 %v923
    %951 = vmatprep.subr.mxu0 0.0
    %952 = vmatpush1.msra.mxu0 %v924
    %953 = vmatprep.subr.mxu0 0.0
    %954 = vmatpush1.msra.mxu0 0.0
    %955 = vmatprep.subr.mxu0 0.0
    %956 = vmatpush1.msra.mxu0 0.0
    %957 = vmatprep.subr.mxu0 0.0
    %958 = vmatpush1.msra.mxu0 0.0
    %959 = vmatprep.subr.mxu0 0.0
    %960 = vmatpush1.msra.mxu0 0.0
    %961 = vmatprep.subr.mxu0 0.0
    %962 = vmatpush1.msra.mxu0 0.0
    %963 = vmatprep.subr.mxu0 0.0
    %964 = vmatpush1.msra.mxu0 0.0
    %965 = vmatprep.subr.mxu0 0.0
    %966 = vmatpush1.msra.mxu0 0.0
    %967 = vmatprep.subr.mxu0 0.0
    %968 = vmatpush1.msra.mxu0 0.0
    %969 = vmatprep.subr.mxu0 0.0
    %970 = vmatpush1.msra.mxu0 0.0
    %971 = vmatprep.subr.mxu0 0.0
    %972 = vmatpush1.msra.mxu0 0.0
    %973 = vmatprep.subr.mxu0 0.0
    %974 = vmatpush1.msra.mxu0 0.0
    %975 = vmatprep.subr.mxu0 0.0
    %976 = vmatpush1.msra.mxu0 0.0
    %977 = vmatprep.subr.mxu0 0.0
    %978 = vmatpush1.msra.mxu0 0.0
    %979 = vmatprep.subr.mxu0 0.0
    %980 = vmatpush1.msra.mxu0 0.0
    %981 = vmatprep.subr.mxu0 0.0
    %982 = vmatpush1.msra.mxu0 0.0
    %983 = vmatprep.subr.mxu0 0.0
    %984 = vmatpush1.msra.mxu0 0.0
    %985 = vmatprep.subr.mxu0 0.0
    %986 = vmatpush1.msra.mxu0 0.0
    %987 = vmatprep.subr.mxu0 0.0
    %988 = vmatpush1.msra.mxu0 0.0
    %989 = vmatprep.subr.mxu0 0.0
    %990 = vmatpush1.msra.mxu0 0.0
    %991 = vmatprep.subr.mxu0 0.0
    %992 = vmatpush1.msra.mxu0 0.0
    %993 = vmatprep.subr.mxu0 0.0
    %994 = vmatpush1.msra.mxu0 0.0
    %995 = vmatprep.subr.mxu0 0.0
    %996 = vmatpush1.msra.mxu0 0.0
    %997 = vmatprep.subr.mxu0 0.0
    %998 = vmatpush1.msra.mxu0 0.0
    %999 = vmatprep.subr.mxu0 0.0
    %1000 = vmatpush1.msra.mxu0 0.0
    %1001 = vmatprep.subr.mxu0 0.0
    %1002 = vmatpush1.msra.mxu0 0.0
    %1003 = vmatprep.subr.mxu0 0.0
    %1004 = vmatpush1.msra.mxu0 0.0
    %1005 = vmatprep.subr.mxu0 0.0
    %1006 = vmatpush1.msra.mxu0 0.0
    %1007 = vmatprep.subr.mxu0 0.0
    %1008 = vmatpush1.msra.mxu0 0.0
    %1009 = vmatprep.mubr.f32.mxu0 0.0
    %1010 = vmatmul.mubr.f32.gmra.mrb[0].mxu0 %v943
    %v1011 = vpop.f32.mrb[0].mxu0
    %v1012 = vadd.f32 %v929, %v1011
    %v1013 = vpop.f32.mrb[0].mxu0
    %1014 = vdwg.mxu0
    %v1015 = vtanh.pop %v1012
    %v1016 = vld [vmem:[%s9] sm:$0xff]
    %v1017 = vld [vmem:[%s9 + $0x8] sm:$0xff]
    %v1018 = vld [vmem:[%s9 + $0x10] sm:$0xff]
    %v1019 = vld [vmem:[%s9 + $0x18] sm:$0xff]
    %v1021 = vsel %vm167, %v1015, 0
    %1023 = vmatprep.subr.mxu0 0.0
    %1024 = vmatpush1.msra.mxu0 %v1016
    %1025 = vmatprep.subr.mxu0 0.0
    %1026 = vmatpush1.msra.mxu0 %v1017
    %1027 = vmatprep.subr.mxu0 0.0
    %1028 = vmatpush1.msra.mxu0 %v1018
    %1029 = vmatprep.subr.mxu0 0.0
    %1030 = vmatpush1.msra.mxu0 %v1019
    %1031 = vmatprep.subr.mxu0 0.0
    %1032 = vmatpush1.msra.mxu0 0.0
    %1033 = vmatprep.subr.mxu0 0.0
    %1034 = vmatpush1.msra.mxu0 0.0
    %1035 = vmatprep.subr.mxu0 0.0
    %1036 = vmatpush1.msra.mxu0 0.0
    %1037 = vmatprep.subr.mxu0 0.0
    %1038 = vmatpush1.msra.mxu0 0.0
    %1039 = vmatprep.subr.mxu0 0.0
    %1040 = vmatpush1.msra.mxu0 0.0
    %1041 = vmatprep.subr.mxu0 0.0
    %1042 = vmatpush1.msra.mxu0 0.0
    %1043 = vmatprep.subr.mxu0 0.0
    %1044 = vmatpush1.msra.mxu0 0.0
    %1045 = vmatprep.subr.mxu0 0.0
    %1046 = vmatpush1.msra.mxu0 0.0
    %1047 = vmatprep.subr.mxu0 0.0
    %1048 = vmatpush1.msra.mxu0 0.0
    %1049 = vmatprep.subr.mxu0 0.0
    %1050 = vmatpush1.msra.mxu0 0.0
    %1051 = vmatprep.subr.mxu0 0.0
    %1052 = vmatpush1.msra.mxu0 0.0
    %1053 = vmatprep.subr.mxu0 0.0
    %1054 = vmatpush1.msra.mxu0 0.0
    %1055 = vmatprep.subr.mxu0 0.0
    %1056 = vmatpush1.msra.mxu0 0.0
    %1057 = vmatprep.subr.mxu0 0.0
    %1058 = vmatpush1.msra.mxu0 0.0
    %1059 = vmatprep.subr.mxu0 0.0
    %1060 = vmatpush1.msra.mxu0 0.0
    %1061 = vmatprep.subr.mxu0 0.0
    %1062 = vmatpush1.msra.mxu0 0.0
    %1063 = vmatprep.subr.mxu0 0.0
    %1064 = vmatpush1.msra.mxu0 0.0
    %1065 = vmatprep.subr.mxu0 0.0
    %1066 = vmatpush1.msra.mxu0 0.0
    %1067 = vmatprep.subr.mxu0 0.0
    %1068 = vmatpush1.msra.mxu0 0.0
    %1069 = vmatprep.subr.mxu0 0.0
    %1070 = vmatpush1.msra.mxu0 0.0
    %1071 = vmatprep.subr.mxu0 0.0
    %1072 = vmatpush1.msra.mxu0 0.0
    %1073 = vmatprep.subr.mxu0 0.0
    %1074 = vmatpush1.msra.mxu0 0.0
    %1075 = vmatprep.subr.mxu0 0.0
    %1076 = vmatpush1.msra.mxu0 0.0
    %1077 = vmatprep.subr.mxu0 0.0
    %1078 = vmatpush1.msra.mxu0 0.0
    %1079 = vmatprep.subr.mxu0 0.0
    %1080 = vmatpush1.msra.mxu0 0.0
    %1081 = vmatprep.subr.mxu0 0.0
    %1082 = vmatpush1.msra.mxu0 0.0
    %1083 = vmatprep.subr.mxu0 0.0
    %1084 = vmatpush1.msra.mxu0 0.0
    %1085 = vmatprep.subr.mxu0 0.0
    %1086 = vmatpush1.msra.mxu0 0.0
    %1087 = vmatprep.mubr.f32.mxu0 0.0
    %1088 = vmatmul.mubr.f32.gmra.mrb[0].mxu0 %v1021
    %v1089 = vpop.f32.mrb[0].mxu0
    %v1090 = vadd.f32 0.0, %v1089
    %v1091 = vpop.f32.mrb[0].mxu0
    %1092 = vdwg.mxu0
    %v1094 = vlaneseq
    %v1095 = vshrl.u32 %v1094, 7
    %v1096 = vsub.s32 0, %v1095
    %v1097 = vrot.slane %v916, %v1096
    %v1099 = vadd.f32 %v1097, %v1090
    %v1100 = vld [vmem:[#allocation2 + $0x1] sm:$0x1]
    %v1101 = vld [vmem:[#allocation2 + $0x3] sm:$0x1]
    %v1102 = vld [vmem:[#allocation2 + $0x5] sm:$0x1]
    %v1103 = vld [vmem:[#allocation2 + $0x7] sm:$0x1]
    %s1104 = scalar_lea.vmem %s7, 32
    %v1105 = vld [vmem:[%s1104] sm:$0xff]
    %v1106 = vld [vmem:[%s1104 + $0x8] sm:$0xff]
    %v1107 = vld [vmem:[%s1104 + $0x10] sm:$0xff]
    %v1108 = vld [vmem:[%s1104 + $0x18] sm:$0xff]
    %v1109 = vld [vmem:[%s8 + $0x1] sm:$0x1]
    %v1110 = vlaneseq
    %v1111 = vshrl.u32 %v1110, 7
    %v1112 = vsub.s32 0, %v1111
    %v1113 = vrot.slane %v1109, %v1112
    %v1118 = vrot.slane %v1101, 7
    %v1119 = vsel %vm935, %v1118, %v1100
    %v1120 = vrot.slane %v1102, 6
    %v1121 = vsel %vm938, %v1120, %v1119
    %v1122 = vrot.slane %v1103, 5
    %v1123 = vsel %vm941, %v1122, %v1121
    %v1124 = vsel %vm167, %v1123, 0
    %1126 = vmatprep.subr.mxu0 0.0
    %1127 = vmatpush1.msra.mxu0 %v1105
    %1128 = vmatprep.subr.mxu0 0.0
    %1129 = vmatpush1.msra.mxu0 %v1106
    %1130 = vmatprep.subr.mxu0 0.0
    %1131 = vmatpush1.msra.mxu0 %v1107
    %1132 = vmatprep.subr.mxu0 0.0
    %1133 = vmatpush1.msra.mxu0 %v1108
    %1134 = vmatprep.subr.mxu0 0.0
    %1135 = vmatpush1.msra.mxu0 0.0
    %1136 = vmatprep.subr.mxu0 0.0
    %1137 = vmatpush1.msra.mxu0 0.0
    %1138 = vmatprep.subr.mxu0 0.0
    %1139 = vmatpush1.msra.mxu0 0.0
    %1140 = vmatprep.subr.mxu0 0.0
    %1141 = vmatpush1.msra.mxu0 0.0
    %1142 = vmatprep.subr.mxu0 0.0
    %1143 = vmatpush1.msra.mxu0 0.0
    %1144 = vmatprep.subr.mxu0 0.0
    %1145 = vmatpush1.msra.mxu0 0.0
    %1146 = vmatprep.subr.mxu0 0.0
    %1147 = vmatpush1.msra.mxu0 0.0
    %1148 = vmatprep.subr.mxu0 0.0
    %1149 = vmatpush1.msra.mxu0 0.0
    %1150 = vmatprep.subr.mxu0 0.0
    %1151 = vmatpush1.msra.mxu0 0.0
    %1152 = vmatprep.subr.mxu0 0.0
    %1153 = vmatpush1.msra.mxu0 0.0
    %1154 = vmatprep.subr.mxu0 0.0
    %1155 = vmatpush1.msra.mxu0 0.0
    %1156 = vmatprep.subr.mxu0 0.0
    %1157 = vmatpush1.msra.mxu0 0.0
    %1158 = vmatprep.subr.mxu0 0.0
    %1159 = vmatpush1.msra.mxu0 0.0
    %1160 = vmatprep.subr.mxu0 0.0
    %1161 = vmatpush1.msra.mxu0 0.0
    %1162 = vmatprep.subr.mxu0 0.0
    %1163 = vmatpush1.msra.mxu0 0.0
    %1164 = vmatprep.subr.mxu0 0.0
    %1165 = vmatpush1.msra.mxu0 0.0
    %1166 = vmatprep.subr.mxu0 0.0
    %1167 = vmatpush1.msra.mxu0 0.0
    %1168 = vmatprep.subr.mxu0 0.0
    %1169 = vmatpush1.msra.mxu0 0.0
    %1170 = vmatprep.subr.mxu0 0.0
    %1171 = vmatpush1.msra.mxu0 0.0
    %1172 = vmatprep.subr.mxu0 0.0
    %1173 = vmatpush1.msra.mxu0 0.0
    %1174 = vmatprep.subr.mxu0 0.0
    %1175 = vmatpush1.msra.mxu0 0.0
    %1176 = vmatprep.subr.mxu0 0.0
    %1177 = vmatpush1.msra.mxu0 0.0
    %1178 = vmatprep.subr.mxu0 0.0
    %1179 = vmatpush1.msra.mxu0 0.0
    %1180 = vmatprep.subr.mxu0 0.0
    %1181 = vmatpush1.msra.mxu0 0.0
    %1182 = vmatprep.subr.mxu0 0.0
    %1183 = vmatpush1.msra.mxu0 0.0
    %1184 = vmatprep.subr.mxu0 0.0
    %1185 = vmatpush1.msra.mxu0 0.0
    %1186 = vmatprep.subr.mxu0 0.0
    %1187 = vmatpush1.msra.mxu0 0.0
    %1188 = vmatprep.subr.mxu0 0.0
    %1189 = vmatpush1.msra.mxu0 0.0
    %1190 = vmatprep.mubr.f32.mxu0 0.0
    %1191 = vmatmul.mubr.f32.gmra.mrb[0].mxu0 %v1124
    %v1192 = vpop.f32.mrb[0].mxu0
    %v1193 = vadd.f32 %v1113, %v1192
    %v1194 = vpop.f32.mrb[0].mxu0
    %1195 = vdwg.mxu0
    %v1196 = vtanh.pop %v1193
    %v1197 = vld [vmem:[%s9 + $0x20] sm:$0xff]
    %v1198 = vld [vmem:[%s9 + $0x28] sm:$0xff]
    %v1199 = vld [vmem:[%s9 + $0x30] sm:$0xff]
    %v1200 = vld [vmem:[%s9 + $0x38] sm:$0xff]
    %v1202 = vsel %vm167, %v1196, 0
    %1204 = vmatprep.subr.mxu0 0.0
    %1205 = vmatpush1.msra.mxu0 %v1197
    %1206 = vmatprep.subr.mxu0 0.0
    %1207 = vmatpush1.msra.mxu0 %v1198
    %1208 = vmatprep.subr.mxu0 0.0
    %1209 = vmatpush1.msra.mxu0 %v1199
    %1210 = vmatprep.subr.mxu0 0.0
    %1211 = vmatpush1.msra.mxu0 %v1200
    %1212 = vmatprep.subr.mxu0 0.0
    %1213 = vmatpush1.msra.mxu0 0.0
    %1214 = vmatprep.subr.mxu0 0.0
    %1215 = vmatpush1.msra.mxu0 0.0
    %1216 = vmatprep.subr.mxu0 0.0
    %1217 = vmatpush1.msra.mxu0 0.0
    %1218 = vmatprep.subr.mxu0 0.0
    %1219 = vmatpush1.msra.mxu0 0.0
    %1220 = vmatprep.subr.mxu0 0.0
    %1221 = vmatpush1.msra.mxu0 0.0
    %1222 = vmatprep.subr.mxu0 0.0
    %1223 = vmatpush1.msra.mxu0 0.0
    %1224 = vmatprep.subr.mxu0 0.0
    %1225 = vmatpush1.msra.mxu0 0.0
    %1226 = vmatprep.subr.mxu0 0.0
    %1227 = vmatpush1.msra.mxu0 0.0
    %1228 = vmatprep.subr.mxu0 0.0
    %1229 = vmatpush1.msra.mxu0 0.0
    %1230 = vmatprep.subr.mxu0 0.0
    %1231 = vmatpush1.msra.mxu0 0.0
    %1232 = vmatprep.subr.mxu0 0.0
    %1233 = vmatpush1.msra.mxu0 0.0
    %1234 = vmatprep.subr.mxu0 0.0
    %1235 = vmatpush1.msra.mxu0 0.0
    %1236 = vmatprep.subr.mxu0 0.0
    %1237 = vmatpush1.msra.mxu0 0.0
    %1238 = vmatprep.subr.mxu0 0.0
    %1239 = vmatpush1.msra.mxu0 0.0
    %1240 = vmatprep.subr.mxu0 0.0
    %1241 = vmatpush1.msra.mxu0 0.0
    %1242 = vmatprep.subr.mxu0 0.0
    %1243 = vmatpush1.msra.mxu0 0.0
    %1244 = vmatprep.subr.mxu0 0.0
    %1245 = vmatpush1.msra.mxu0 0.0
    %1246 = vmatprep.subr.mxu0 0.0
    %1247 = vmatpush1.msra.mxu0 0.0
    %1248 = vmatprep.subr.mxu0 0.0
    %1249 = vmatpush1.msra.mxu0 0.0
    %1250 = vmatprep.subr.mxu0 0.0
    %1251 = vmatpush1.msra.mxu0 0.0
    %1252 = vmatprep.subr.mxu0 0.0
    %1253 = vmatpush1.msra.mxu0 0.0
    %1254 = vmatprep.subr.mxu0 0.0
    %1255 = vmatpush1.msra.mxu0 0.0
    %1256 = vmatprep.subr.mxu0 0.0
    %1257 = vmatpush1.msra.mxu0 0.0
    %1258 = vmatprep.subr.mxu0 0.0
    %1259 = vmatpush1.msra.mxu0 0.0
    %1260 = vmatprep.subr.mxu0 0.0
    %1261 = vmatpush1.msra.mxu0 0.0
    %1262 = vmatprep.subr.mxu0 0.0
    %1263 = vmatpush1.msra.mxu0 0.0
    %1264 = vmatprep.subr.mxu0 0.0
    %1265 = vmatpush1.msra.mxu0 0.0
    %1266 = vmatprep.subr.mxu0 0.0
    %1267 = vmatpush1.msra.mxu0 0.0
    %1268 = vmatprep.mubr.f32.mxu0 0.0
    %1269 = vmatmul.mubr.f32.gmra.mrb[0].mxu0 %v1202
    %v1270 = vpop.f32.mrb[0].mxu0
    %v1271 = vadd.f32 0.0, %v1270
    %v1272 = vpop.f32.mrb[0].mxu0
    %1273 = vdwg.mxu0
    %v1274 = vadd.f32 %v1099, %v1271
    %v1275 = vtanh.pop %v1274
    %v1276 = vld [vmem:[%s11] sm:$0xff]
    %v1277 = vld [vmem:[%s11 + $0x8] sm:$0xff]
    %v1278 = vld [vmem:[%s11 + $0x10] sm:$0xff]
    %v1279 = vld [vmem:[%s11 + $0x18] sm:$0xff]
    %v1280 = vld [vmem:[%s12] sm:$0x1]
    %v1282 = vlaneseq
    %v1283 = vshrl.u32 %v1282, 7
    %v1284 = vsub.s32 0, %v1283
    %v1285 = vrot.slane %v1280, %v1284
    %1287 = vrot.lane.b32.xlu0 %v154, 96
    %v1288 = vpop.permute.xlu0 %1287
    %v1289 = vsel %vm167, %v1288, 0
    %1291 = vmatprep.subr.mxu0 0.0
    %1292 = vmatpush1.msra.mxu0 %v1276
    %1293 = vmatprep.subr.mxu0 0.0
    %1294 = vmatpush1.msra.mxu0 %v1277
    %1295 = vmatprep.subr.mxu0 0.0
    %1296 = vmatpush1.msra.mxu0 %v1278
    %1297 = vmatprep.subr.mxu0 0.0
    %1298 = vmatpush1.msra.mxu0 %v1279
    %1299 = vmatprep.subr.mxu0 0.0
    %1300 = vmatpush1.msra.mxu0 0.0
    %1301 = vmatprep.subr.mxu0 0.0
    %1302 = vmatpush1.msra.mxu0 0.0
    %1303 = vmatprep.subr.mxu0 0.0
    %1304 = vmatpush1.msra.mxu0 0.0
    %1305 = vmatprep.subr.mxu0 0.0
    %1306 = vmatpush1.msra.mxu0 0.0
    %1307 = vmatprep.subr.mxu0 0.0
    %1308 = vmatpush1.msra.mxu0 0.0
    %1309 = vmatprep.subr.mxu0 0.0
    %1310 = vmatpush1.msra.mxu0 0.0
    %1311 = vmatprep.subr.mxu0 0.0
    %1312 = vmatpush1.msra.mxu0 0.0
    %1313 = vmatprep.subr.mxu0 0.0
    %1314 = vmatpush1.msra.mxu0 0.0
    %1315 = vmatprep.subr.mxu0 0.0
    %1316 = vmatpush1.msra.mxu0 0.0
    %1317 = vmatprep.subr.mxu0 0.0
    %1318 = vmatpush1.msra.mxu0 0.0
    %1319 = vmatprep.subr.mxu0 0.0
    %1320 = vmatpush1.msra.mxu0 0.0
    %1321 = vmatprep.subr.mxu0 0.0
    %1322 = vmatpush1.msra.mxu0 0.0
    %1323 = vmatprep.subr.mxu0 0.0
    %1324 = vmatpush1.msra.mxu0 0.0
    %1325 = vmatprep.subr.mxu0 0.0
    %1326 = vmatpush1.msra.mxu0 0.0
    %1327 = vmatprep.subr.mxu0 0.0
    %1328 = vmatpush1.msra.mxu0 0.0
    %1329 = vmatprep.subr.mxu0 0.0
    %1330 = vmatpush1.msra.mxu0 0.0
    %1331 = vmatprep.subr.mxu0 0.0
    %1332 = vmatpush1.msra.mxu0 0.0
    %1333 = vmatprep.subr.mxu0 0.0
    %1334 = vmatpush1.msra.mxu0 0.0
    %1335 = vmatprep.subr.mxu0 0.0
    %1336 = vmatpush1.msra.mxu0 0.0
    %1337 = vmatprep.subr.mxu0 0.0
    %1338 = vmatpush1.msra.mxu0 0.0
    %1339 = vmatprep.subr.mxu0 0.0
    %1340 = vmatpush1.msra.mxu0 0.0
    %1341 = vmatprep.subr.mxu0 0.0
    %1342 = vmatpush1.msra.mxu0 0.0
    %1343 = vmatprep.subr.mxu0 0.0
    %1344 = vmatpush1.msra.mxu0 0.0
    %1345 = vmatprep.subr.mxu0 0.0
    %1346 = vmatpush1.msra.mxu0 0.0
    %1347 = vmatprep.subr.mxu0 0.0
    %1348 = vmatpush1.msra.mxu0 0.0
    %1349 = vmatprep.subr.mxu0 0.0
    %1350 = vmatpush1.msra.mxu0 0.0
    %1351 = vmatprep.subr.mxu0 0.0
    %1352 = vmatpush1.msra.mxu0 0.0
    %1353 = vmatprep.subr.mxu0 0.0
    %1354 = vmatpush1.msra.mxu0 0.0
    %1355 = vmatprep.mubr.f32.mxu0 0.0
    %1356 = vmatmul.mubr.f32.gmra.mrb[0].mxu0 %v1289
    %v1357 = vpop.f32.mrb[0].mxu0
    %v1358 = vadd.f32 %v1285, %v1357
    %v1359 = vpop.f32.mrb[0].mxu0
    %1360 = vdwg.mxu0
    %v1361 = vtanh.pop %v1358
    %v1362 = vmul.f32 %v1275, %v1361
    %1364 = vrot.lane.b32.xlu0 %v1362, 96
    %v1365 = vpop.permute.xlu0 %1364
    %v1367 = vadd.f32 %v1362, %v1365
    %1368 = vrot.lane.b32.xlu0 %v1362, 64
    %v1369 = vpop.permute.xlu0 %1368
    %v1371 = vadd.f32 %v1367, %v1369
    %v1372 = vtanh.pop %v1371
    %v1373 = vtanh.pop %v1372
    %v1374 = vld [vmem:[%s13] sm:$0xff]
    %v1375 = vld [vmem:[%s13 + $0x8] sm:$0xff]
    %v1376 = vld [vmem:[%s13 + $0x10] sm:$0xff]
    %v1377 = vld [vmem:[%s13 + $0x18] sm:$0xff]
    %v1378 = vld [vmem:[%s14] sm:$0x1]
    %v1380 = vlaneseq
    %v1381 = vshrl.u32 %v1380, 7
    %v1382 = vsub.s32 0, %v1381
    %v1383 = vrot.slane %v1378, %v1382
    %v1386 = vsel %vm167, %v1373, 0
    %1388 = vmatprep.subr.mxu0 0.0
    %1389 = vmatpush1.msra.mxu0 %v1374
    %1390 = vmatprep.subr.mxu0 0.0
    %1391 = vmatpush1.msra.mxu0 %v1375
    %1392 = vmatprep.subr.mxu0 0.0
    %1393 = vmatpush1.msra.mxu0 %v1376
    %1394 = vmatprep.subr.mxu0 0.0
    %1395 = vmatpush1.msra.mxu0 %v1377
    %1396 = vmatprep.subr.mxu0 0.0
    %1397 = vmatpush1.msra.mxu0 0.0
    %1398 = vmatprep.subr.mxu0 0.0
    %1399 = vmatpush1.msra.mxu0 0.0
    %1400 = vmatprep.subr.mxu0 0.0
    %1401 = vmatpush1.msra.mxu0 0.0
    %1402 = vmatprep.subr.mxu0 0.0
    %1403 = vmatpush1.msra.mxu0 0.0
    %1404 = vmatprep.subr.mxu0 0.0
    %1405 = vmatpush1.msra.mxu0 0.0
    %1406 = vmatprep.subr.mxu0 0.0
    %1407 = vmatpush1.msra.mxu0 0.0
    %1408 = vmatprep.subr.mxu0 0.0
    %1409 = vmatpush1.msra.mxu0 0.0
    %1410 = vmatprep.subr.mxu0 0.0
    %1411 = vmatpush1.msra.mxu0 0.0
    %1412 = vmatprep.subr.mxu0 0.0
    %1413 = vmatpush1.msra.mxu0 0.0
    %1414 = vmatprep.subr.mxu0 0.0
    %1415 = vmatpush1.msra.mxu0 0.0
    %1416 = vmatprep.subr.mxu0 0.0
    %1417 = vmatpush1.msra.mxu0 0.0
    %1418 = vmatprep.subr.mxu0 0.0
    %1419 = vmatpush1.msra.mxu0 0.0
    %1420 = vmatprep.subr.mxu0 0.0
    %1421 = vmatpush1.msra.mxu0 0.0
    %1422 = vmatprep.subr.mxu0 0.0
    %1423 = vmatpush1.msra.mxu0 0.0
    %1424 = vmatprep.subr.mxu0 0.0
    %1425 = vmatpush1.msra.mxu0 0.0
    %1426 = vmatprep.subr.mxu0 0.0
    %1427 = vmatpush1.msra.mxu0 0.0
    %1428 = vmatprep.subr.mxu0 0.0
    %1429 = vmatpush1.msra.mxu0 0.0
    %1430 = vmatprep.subr.mxu0 0.0
    %1431 = vmatpush1.msra.mxu0 0.0
    %1432 = vmatprep.subr.mxu0 0.0
    %1433 = vmatpush1.msra.mxu0 0.0
    %1434 = vmatprep.subr.mxu0 0.0
    %1435 = vmatpush1.msra.mxu0 0.0
    %1436 = vmatprep.subr.mxu0 0.0
    %1437 = vmatpush1.msra.mxu0 0.0
    %1438 = vmatprep.subr.mxu0 0.0
    %1439 = vmatpush1.msra.mxu0 0.0
    %1440 = vmatprep.subr.mxu0 0.0
    %1441 = vmatpush1.msra.mxu0 0.0
    %1442 = vmatprep.subr.mxu0 0.0
    %1443 = vmatpush1.msra.mxu0 0.0
    %1444 = vmatprep.subr.mxu0 0.0
    %1445 = vmatpush1.msra.mxu0 0.0
    %1446 = vmatprep.subr.mxu0 0.0
    %1447 = vmatpush1.msra.mxu0 0.0
    %1448 = vmatprep.subr.mxu0 0.0
    %1449 = vmatpush1.msra.mxu0 0.0
    %1450 = vmatprep.subr.mxu0 0.0
    %1451 = vmatpush1.msra.mxu0 0.0
    %1452 = vmatprep.mubr.f32.mxu0 0.0
    %1453 = vmatmul.mubr.f32.gmra.mrb[0].mxu0 %v1386
    %v1454 = vpop.f32.mrb[0].mxu0
    %v1455 = vadd.f32 %v1383, %v1454
    %v1456 = vpop.f32.mrb[0].mxu0
    %1457 = vdwg.mxu0
    %vm1458 = vcmask 156672
    %1459 = vst.msk [vmem:[#allocation3] sm:$0x3] %vm1458, %v1455
    %v1460 = vld [vmem:[%s15] sm:$0xff]
    %v1461 = vld [vmem:[%s15 + $0x8] sm:$0xff]
    %v1462 = vld [vmem:[%s15 + $0x10] sm:$0xff]
    %v1463 = vld [vmem:[%s15 + $0x18] sm:$0xff]
    %v1464 = vld [vmem:[%s16] sm:$0x1]
    %v1466 = vlaneseq
    %v1467 = vshrl.u32 %v1466, 7
    %v1468 = vsub.s32 0, %v1467
    %v1469 = vrot.slane %v1464, %v1468
    %v1471 = vrot.slane %v1373, 2
    %v1472 = vsel %vm167, %v1471, 0
    %1474 = vmatprep.subr.mxu0 0.0
    %1475 = vmatpush1.msra.mxu0 %v1460
    %1476 = vmatprep.subr.mxu0 0.0
    %1477 = vmatpush1.msra.mxu0 %v1461
    %1478 = vmatprep.subr.mxu0 0.0
    %1479 = vmatpush1.msra.mxu0 %v1462
    %1480 = vmatprep.subr.mxu0 0.0
    %1481 = vmatpush1.msra.mxu0 %v1463
    %1482 = vmatprep.subr.mxu0 0.0
    %1483 = vmatpush1.msra.mxu0 0.0
    %1484 = vmatprep.subr.mxu0 0.0
    %1485 = vmatpush1.msra.mxu0 0.0
    %1486 = vmatprep.subr.mxu0 0.0
    %1487 = vmatpush1.msra.mxu0 0.0
    %1488 = vmatprep.subr.mxu0 0.0
    %1489 = vmatpush1.msra.mxu0 0.0
    %1490 = vmatprep.subr.mxu0 0.0
    %1491 = vmatpush1.msra.mxu0 0.0
    %1492 = vmatprep.subr.mxu0 0.0
    %1493 = vmatpush1.msra.mxu0 0.0
    %1494 = vmatprep.subr.mxu0 0.0
    %1495 = vmatpush1.msra.mxu0 0.0
    %1496 = vmatprep.subr.mxu0 0.0
    %1497 = vmatpush1.msra.mxu0 0.0
    %1498 = vmatprep.subr.mxu0 0.0
    %1499 = vmatpush1.msra.mxu0 0.0
    %1500 = vmatprep.subr.mxu0 0.0
    %1501 = vmatpush1.msra.mxu0 0.0
    %1502 = vmatprep.subr.mxu0 0.0
    %1503 = vmatpush1.msra.mxu0 0.0
    %1504 = vmatprep.subr.mxu0 0.0
    %1505 = vmatpush1.msra.mxu0 0.0
    %1506 = vmatprep.subr.mxu0 0.0
    %1507 = vmatpush1.msra.mxu0 0.0
    %1508 = vmatprep.subr.mxu0 0.0
    %1509 = vmatpush1.msra.mxu0 0.0
    %1510 = vmatprep.subr.mxu0 0.0
    %1511 = vmatpush1.msra.mxu0 0.0
    %1512 = vmatprep.subr.mxu0 0.0
    %1513 = vmatpush1.msra.mxu0 0.0
    %1514 = vmatprep.subr.mxu0 0.0
    %1515 = vmatpush1.msra.mxu0 0.0
    %1516 = vmatprep.subr.mxu0 0.0
    %1517 = vmatpush1.msra.mxu0 0.0
    %1518 = vmatprep.subr.mxu0 0.0
    %1519 = vmatpush1.msra.mxu0 0.0
    %1520 = vmatprep.subr.mxu0 0.0
    %1521 = vmatpush1.msra.mxu0 0.0
    %1522 = vmatprep.subr.mxu0 0.0
    %1523 = vmatpush1.msra.mxu0 0.0
    %1524 = vmatprep.subr.mxu0 0.0
    %1525 = vmatpush1.msra.mxu0 0.0
    %1526 = vmatprep.subr.mxu0 0.0
    %1527 = vmatpush1.msra.mxu0 0.0
    %1528 = vmatprep.subr.mxu0 0.0
    %1529 = vmatpush1.msra.mxu0 0.0
    %1530 = vmatprep.subr.mxu0 0.0
    %1531 = vmatpush1.msra.mxu0 0.0
    %1532 = vmatprep.subr.mxu0 0.0
    %1533 = vmatpush1.msra.mxu0 0.0
    %1534 = vmatprep.subr.mxu0 0.0
    %1535 = vmatpush1.msra.mxu0 0.0
    %1536 = vmatprep.subr.mxu0 0.0
    %1537 = vmatpush1.msra.mxu0 0.0
    %1538 = vmatprep.mubr.f32.mxu0 0.0
    %1539 = vmatmul.mubr.f32.gmra.mrb[0].mxu0 %v1472
    %v1540 = vpop.f32.mrb[0].mxu0
    %v1541 = vadd.f32 %v1469, %v1540
    %v1542 = vpop.f32.mrb[0].mxu0
    %1543 = vdwg.mxu0
    %v1544 = vtanh.pop %v1541
    %v1545 = vld [vmem:[%s17] sm:$0xff]
    %v1546 = vld [vmem:[%s17 + $0x8] sm:$0xff]
    %v1549 = vunpack.c.l.s4 1966171168
    %v1550 = vunpack.c.0.s8 %v1549
    %v1551 = vlaneseq
    %v1552 = vshrl.u32 %v1551, 7
    %v1553 = vsub.s32 %v1550, %v1552
    %v1554 = vrot.slane %v1544, %v1553
    %v1555 = vcombine.high %v1554, %v1554
    %v1557 = vunpack.c.l.s4 1966171168
    %v1558 = vunpack.c.0.s8 %v1557
    %v1559 = vlaneseq
    %v1560 = vshrl.u32 %v1559, 7
    %v1561 = vsub.s32 %v1558, %v1560
    %v1562 = vrot.slane %v1554, %v1561
    %v1564 = vunpack.c.l.s4 1966171168
    %v1565 = vunpack.c.0.s8 %v1564
    %v1566 = vlaneseq
    %v1567 = vshrl.u32 %v1566, 7
    %v1568 = vsub.s32 %v1565, %v1567
    %v1569 = vrot.slane %v1555, %v1568
    %v1570 = vlaneseq
    %v1571 = vshrl.u32 %v1570, 7
    %v1572 = vsub.s32 0, %v1571
    %v1573 = vrot.slane %v1562, %v1572
    %v1574 = vlaneseq
    %v1575 = vshrl.u32 %v1574, 7
    %v1576 = vsub.s32 0, %v1575
    %v1577 = vrot.slane %v1569, %v1576
    %v1580 = vadd.f32 %v1545, %v1573
    %v1581 = vadd.f32 %v1546, %v1577
    %v1582 = vtanh.pop %v1580
    %v1583 = vtanh.pop %v1581
    %v1584 = vld [vmem:[%s18] sm:$0xff]
    %v1585 = vld [vmem:[%s18 + $0x8] sm:$0xff]
    %v1586 = vld [vmem:[%s18 + $0x10] sm:$0xff]
    %v1587 = vld [vmem:[%s18 + $0x18] sm:$0xff]
    %v1588 = vld [vmem:[%s19] sm:$0x1]
    %v1590 = vlaneseq
    %v1591 = vshrl.u32 %v1590, 7
    %v1592 = vsub.s32 0, %v1591
    %v1593 = vrot.slane %v1588, %v1592
    %v1596 = vsel %vm167, %v1582, 0
    %v1599 = vsel %vm167, %v1583, 0
    %1601 = vmatprep.subr.mxu0 0.0
    %1602 = vmatpush1.msra.mxu0 %v1584
    %1603 = vmatprep.subr.mxu0 0.0
    %1604 = vmatpush1.msra.mxu0 %v1585
    %1605 = vmatprep.subr.mxu0 0.0
    %1606 = vmatpush1.msra.mxu0 %v1586
    %1607 = vmatprep.subr.mxu0 0.0
    %1608 = vmatpush1.msra.mxu0 %v1587
    %1609 = vmatprep.subr.mxu0 0.0
    %1610 = vmatpush1.msra.mxu0 0.0
    %1611 = vmatprep.subr.mxu0 0.0
    %1612 = vmatpush1.msra.mxu0 0.0
    %1613 = vmatprep.subr.mxu0 0.0
    %1614 = vmatpush1.msra.mxu0 0.0
    %1615 = vmatprep.subr.mxu0 0.0
    %1616 = vmatpush1.msra.mxu0 0.0
    %1617 = vmatprep.subr.mxu0 0.0
    %1618 = vmatpush1.msra.mxu0 0.0
    %1619 = vmatprep.subr.mxu0 0.0
    %1620 = vmatpush1.msra.mxu0 0.0
    %1621 = vmatprep.subr.mxu0 0.0
    %1622 = vmatpush1.msra.mxu0 0.0
    %1623 = vmatprep.subr.mxu0 0.0
    %1624 = vmatpush1.msra.mxu0 0.0
    %1625 = vmatprep.subr.mxu0 0.0
    %1626 = vmatpush1.msra.mxu0 0.0
    %1627 = vmatprep.subr.mxu0 0.0
    %1628 = vmatpush1.msra.mxu0 0.0
    %1629 = vmatprep.subr.mxu0 0.0
    %1630 = vmatpush1.msra.mxu0 0.0
    %1631 = vmatprep.subr.mxu0 0.0
    %1632 = vmatpush1.msra.mxu0 0.0
    %1633 = vmatprep.subr.mxu0 0.0
    %1634 = vmatpush1.msra.mxu0 0.0
    %1635 = vmatprep.subr.mxu0 0.0
    %1636 = vmatpush1.msra.mxu0 0.0
    %1637 = vmatprep.subr.mxu0 0.0
    %1638 = vmatpush1.msra.mxu0 0.0
    %1639 = vmatprep.subr.mxu0 0.0
    %1640 = vmatpush1.msra.mxu0 0.0
    %1641 = vmatprep.subr.mxu0 0.0
    %1642 = vmatpush1.msra.mxu0 0.0
    %1643 = vmatprep.subr.mxu0 0.0
    %1644 = vmatpush1.msra.mxu0 0.0
    %1645 = vmatprep.subr.mxu0 0.0
    %1646 = vmatpush1.msra.mxu0 0.0
    %1647 = vmatprep.subr.mxu0 0.0
    %1648 = vmatpush1.msra.mxu0 0.0
    %1649 = vmatprep.subr.mxu0 0.0
    %1650 = vmatpush1.msra.mxu0 0.0
    %1651 = vmatprep.subr.mxu0 0.0
    %1652 = vmatpush1.msra.mxu0 0.0
    %1653 = vmatprep.subr.mxu0 0.0
    %1654 = vmatpush1.msra.mxu0 0.0
    %1655 = vmatprep.subr.mxu0 0.0
    %1656 = vmatpush1.msra.mxu0 0.0
    %1657 = vmatprep.subr.mxu0 0.0
    %1658 = vmatpush1.msra.mxu0 0.0
    %1659 = vmatprep.subr.mxu0 0.0
    %1660 = vmatpush1.msra.mxu0 0.0
    %1661 = vmatprep.subr.mxu0 0.0
    %1662 = vmatpush1.msra.mxu0 0.0
    %1663 = vmatprep.subr.mxu0 0.0
    %1664 = vmatpush1.msra.mxu0 0.0
    %1665 = vmatprep.mubr.f32.mxu0 0.0
    %1666 = vmatmul.mubr.f32.gmra.mrb[0].mxu0 %v1596
    %v1667 = vpop.f32.mrb[0].mxu0
    %v1668 = vadd.f32 %v1593, %v1667
    %v1669 = vpop.f32.mrb[0].mxu0
    %1670 = vmatprep.mubr.f32.mxu0 0.0
    %1671 = vmatmul.mubr.f32.gmra.mrb[0].mxu0 %v1599
    %v1672 = vpop.f32.mrb[0].mxu0
    %v1673 = vadd.f32 %v1593, %v1672
    %v1674 = vpop.f32.mrb[0].mxu0
    %1675 = vdwg.mxu0
    %vm1676 = vcmask 408576
    %1677 = vst.msk [vmem:[#allocation5] sm:$0xff] %vm1676, %v1668
    %1678 = vst.msk [vmem:[#allocation5 + $0x8] sm:$0xff] %vm1676, %v1673
    %v1680 = vrot.slane %v151, 2
    %1681 = vrot.lane.b32.xlu0 %v1680, 96
    %v1682 = vpop.permute.xlu0 %1681
    %v1684 = vsub.f32 %v1372, %v1682
    %v1685 = vand.u32 2147483647, %v1684
    %vm1686 = vcmp.lt.f32.partialorder %v1685, 1.0
    %v1687 = vmul.f32 %v1684, 0.5
    %v1688 = vmul.f32 %v1687, %v1684
    %v1689 = vsub.f32 %v1685, 0.5
    %v1690 = vsel %vm1686, %v1688, %v1689
    %v1691 = vsel %vm911, %v1690, 0.0
    %1692 = vadd.xlane.f32.xlu0 %v1691
    %v1693 = vpop.xlane.xlu0 %1692
    %v1694 = vrot.slane %v1693, 4
    %v1695 = vadd.f32 %v1693, %v1694
    %v1696 = vrot.slane %v1695, 2
    %v1697 = vadd.f32 %v1695, %v1696
    %v1698 = vrot.slane %v1697, 1
    %v1699 = vadd.f32 %v1697, %v1698
    %s1700 = vtos %v1699
    %v1701 = vrcp.pop 64.0
    %s1702 = vtos %v1701
    %s1703 = smul.f32 %s1700, %s1702
    %v1704 = vrot.slane %v151, 6
    %1705 = vrot.lane.b32.xlu0 %v1704, 96
    %v1706 = vpop.permute.xlu0 %1705
    %v1708 = vsub.f32 %v1372, %v1706
    %v1709 = vand.u32 2147483647, %v1708
    %vm1710 = vcmp.lt.f32.partialorder %v1709, 1.0
    %v1711 = vmul.f32 %v1708, 0.5
    %v1712 = vmul.f32 %v1711, %v1708
    %v1713 = vsub.f32 %v1709, 0.5
    %v1714 = vsel %vm1710, %v1712, %v1713
    %v1716 = vrot.slane %v1714, 2
    %v1718 = vsel %vm911, %v1716, 0.0
    %1719 = vadd.xlane.f32.xlu0 %v1718
    %v1720 = vpop.xlane.xlu0 %1719
    %v1721 = vrot.slane %v1720, 4
    %v1722 = vadd.f32 %v1720, %v1721
    %v1723 = vrot.slane %v1722, 2
    %v1724 = vadd.f32 %v1722, %v1723
    %v1725 = vrot.slane %v1724, 1
    %v1726 = vadd.f32 %v1724, %v1725
    %s1727 = vtos %v1726
    %v1728 = vrcp.pop 64.0
    %s1729 = vtos %v1728
    %s1730 = smul.f32 %s1727, %s1729
    %s1731 = sadd.f32 %s1703, %s1730
    %v1732 = vstv %s1731
    %vm1733 = vcmask 0
    %1734 = vst.msk [vmem:[#allocation7] sm:$0x1] %vm1733, %v1732
    // Predicated region
    $region82: #{dual_model_forward.1} parent=1 // pred_check
      _
    $region83: #{dual_model_forward.1} parent=1 // pred_check_branch
      %1736 = sbr.rel (0) target = $region85
    $region84: #{dual_model_forward.1} parent=1 // pred_region
      %s1738 = ssub.s32 32, 32
      %1739 = vsyncadd [#allocation4], %s1738
      %s1741 = sshll.u32 [#allocation3], 4
      %s1742 = int_to_ptr.vmem [resolvable:$true] %s1741
      %1744 = dma.vmem_to_hbm [thread:$0]  %s1742, 32, %s20, [#allocation4]
    $region85: #{dual_model_forward.1} parent=1 // pred_fallthru
      _
    // Predicated region
    $region86: #{dual_model_forward.1} parent=1 // pred_check
      _
    $region87: #{dual_model_forward.1} parent=1 // pred_check_branch
      %1746 = sbr.rel (0) target = $region89
    $region88: #{dual_model_forward.1} parent=1 // pred_region
      %s1748 = ssub.s32 256, 256
      %1749 = vsyncadd [#allocation6], %s1748
      %s1750 = sshll.u32 [#allocation5], 4
      %s1751 = int_to_ptr.vmem [resolvable:$true] %s1750
      %1756 = dma.vmem_to_hbm [thread:$0]  %s1751, 256, %s21, [#allocation6], 128, 128, 8
    $region89: #{dual_model_forward.1} parent=1 // pred_fallthru
      _
    // Predicated region
    $region90: #{dual_model_forward.1} parent=1 // pred_check
      _
    $region91: #{dual_model_forward.1} parent=1 // pred_check_branch
      %1758 = sbr.rel (0) target = $region93
    $region92: #{dual_model_forward.1} parent=1 // pred_region
      %s1760 = ssub.s32 16, 16
      %1761 = vsyncadd [#allocation6], %s1760
      %s1763 = sshll.u32 [#allocation7], 4
      %s1764 = int_to_ptr.vmem [resolvable:$true] %s1763
      %1766 = dma.vmem_to_hbm [thread:$0]  %s1764, 16, %s22, [#allocation6]
    $region93: #{dual_model_forward.1} parent=1 // pred_fallthru
      _
    // Predicated region
    $region94: #{dual_model_forward.1} parent=1 // pred_check
      _
    $region95: #{dual_model_forward.1} parent=1 // pred_check_branch
      %1768 = sbr.rel (0) target = $region97
    $region96: #{dual_model_forward.1} parent=1 // pred_region
      %1769 = dma.done [#allocation4], 32
    $region97: #{dual_model_forward.1} parent=1 // pred_fallthru
      _
    // Predicated region
    $region98: #{dual_model_forward.1} parent=1 // pred_check
      _
    $region99: #{dual_model_forward.1} parent=1 // pred_check_branch
      %1771 = sbr.rel (0) target = $region101
    $region100: #{dual_model_forward.1} parent=1 // pred_region
      %1772 = dma.done [#allocation6], 256
    $region101: #{dual_model_forward.1} parent=1 // pred_fallthru
      _
    // Predicated region
    $region102: #{dual_model_forward.1} parent=1 // pred_check
      _
    $region103: #{dual_model_forward.1} parent=1 // pred_check_branch
      %1774 = sbr.rel (0) target = $region105
    $region104: #{dual_model_forward.1} parent=1 // pred_region
      %1775 = dma.done [#allocation6], 16
    $region105: #{dual_model_forward.1} parent=1 // pred_fallthru
      _
    %1776 = vsyncpa [#allocation4], 1
    %1777 = vsyncpa [#allocation6], 1

</llo_original>
